<compile_context>
chip_gen: v6e
topology: v6e:2x2x1
jax: 0.10.0
libtpu: 0.0.40
codegen_flags: <defaults>
</compile_context>

<pallas_src>
import jax
import jax.numpy as jnp
from jax.experimental import pallas as pl
from jax.experimental.pallas import tpu as pltpu


_MAX_STATIC_UNROLL = 8    # chunks up to this length are fully unrolled
_FORI_UNROLL = 8          # bounded unroll for longer chunks (vreg pressure)

# Lazily-probed: does this JAX support pl.Buffered(1) single-buffered weights?
_SINGLE_BUFFER_WEIGHTS_OK = None


def _round_up(n, m):
    return ((n + m - 1) // m) * m


def _vmem_capacity_bytes():
    """Per-core VMEM capacity; falls back to the v7x floor (64 MiB)."""
    try:
        return int(pltpu.get_tpu_info().vmem_capacity_bytes)
    except Exception:
        return 64 << 20


def _pick_chunk_t(T, BB, I, Hp, O, *, proj_bytes, recur_bytes,
                  vmem_budget, max_chunk=512):
    """Largest time-chunk dividing T whose full VMEM footprint (double-buffered
    x tile + f32 u scratch + weights + h + output) fits the budget."""
    def vmem_need(ct):
        x_tile = 2 * ct * BB * I * proj_bytes              # pipelined x tile
        u_buf = ct * BB * Hp * 4                           # f32 projection scratch
        weights = 2 * (I * Hp * proj_bytes + Hp * Hp * recur_bytes
                       + Hp * O * proj_bytes + Hp * 4 + O * 4)
        h_buf = BB * Hp * 4
        out_buf = 2 * BB * O * 4
        return x_tile + u_buf + weights + h_buf + out_buf

    divisors = [ct for ct in range(1, min(T, max_chunk) + 1) if T % ct == 0]
    fitting = [ct for ct in divisors if vmem_need(ct) <= vmem_budget]
    if fitting:
        return max(fitting)
    return divisors[0] if divisors else 1


def _rnn_kernel(x_ref, wx_ref, b_ref, wh_ref, wo_ref, bo_ref, o_ref,
                h_ref, u_ref):
    """One grid step = one (batch block, time chunk).

    x_ref : (CT, BB, I)  proj dtype     wx_ref: (I, Hp)  proj dtype
    b_ref : (1, Hp) f32 (bx+bh folded)  wh_ref: (Hp, Hp) recur dtype
    wo_ref: (Hp, O) proj dtype          bo_ref: (1, O)   f32
    o_ref : (BB, O) f32 output          h_ref : (BB, Hp) f32 scratch (carried)
    u_ref : (CT*BB, Hp) f32 scratch (per-chunk input projection, time-major)
    """
    t = pl.program_id(1)                  # time-chunk index (axis 1 of grid)
    CT, BB, I = x_ref.shape
    recur_dtype = wh_ref.dtype

    @pl.when(t == 0)
    def _():
        h_ref[...] = jnp.zeros_like(h_ref)

    # Hoisted input projection for the whole chunk: one MXU matmul + one
    # broadcast bias add, written time-major so each step's u_t is a free,
    # 8-aligned leading-(sublane)-dim slice (no per-step relayout).
    x2d = x_ref[...].reshape(CT * BB, I)
    u_ref[...] = (jnp.dot(x2d, wx_ref[...], preferred_element_type=jnp.float32)
                  + b_ref[...])

    # TODO(synk): weight-stationary MXU drive (pltpu.matmul_push_rhs /
    # matmul_acc_lhs / matmul_pop) so Wh is pushed once per chunk.
    wh = wh_ref[...]

    def step(tt, h):
        start = tt * BB                            # BB is a multiple of 8
        if not isinstance(start, int):
            start = pl.multiple_of(start, 8)
        u_t = u_ref[pl.ds(start, BB), :]
        pre = jnp.dot(h.astype(recur_dtype), wh,
                      preferred_element_type=jnp.float32) + u_t
        return jnp.tanh(pre)

    h = h_ref[...]                                 # f32 carried state
    if CT <= _MAX_STATIC_UNROLL:
        for tt in range(CT):                       # short chunk: full unroll
            h = step(tt, h)
    else:
        # Bounded unroll keeps vreg pressure in check for large BB*Hp while
        # still giving the scheduler a window to overlap MXU/EUP work.
        unr = _FORI_UNROLL
        while CT % unr:
            unr //= 2
        h = jax.lax.fori_loop(0, CT, step, h, unroll=max(unr, 1))
    h_ref[...] = h

    # Final linear head, only on the last time chunk of this batch block.
    @pl.when(t == pl.num_programs(1) - 1)
    def _():
        out = (jnp.dot(h.astype(wo_ref.dtype), wo_ref[...],
                       preferred_element_type=jnp.float32) + bo_ref[...])
        o_ref[...] = out.astype(o_ref.dtype)


def _make_rnn_call(*, T, I, O, Hp, BB, n_bblk, chunk_t, proj_dtype,
                   recur_dtype, single_buffer_weights, vmem_limit, cost):
    del proj_dtype, recur_dtype  # dtypes are carried by the operands
    n_chunks = T // chunk_t

    res_kwargs = {}
    if single_buffer_weights:
        # Constant-index residents never change: single buffer halves their
        # VMEM footprint (important for v7x 64 MiB / v5e 16 MiB scoped default).
        res_kwargs = dict(pipeline_mode=pl.Buffered(1))

    def resident(shape):
        return pl.BlockSpec(shape, lambda b, c: (0, 0), **res_kwargs)

    grid_spec = pltpu.PrefetchScalarGridSpec(
        num_scalar_prefetch=0,
        grid=(n_bblk, n_chunks),                       # (batch blocks, time)
        in_specs=[
            # time-major x tiles, auto double-buffered across the time axis
            pl.BlockSpec((chunk_t, BB, I), lambda b, c: (c, b, 0)),
            resident((I, Hp)),                         # Wx
            resident((1, Hp)),                         # bx + bh (folded)
            resident((Hp, Hp)),                        # Wh
            resident((Hp, O)),                         # Wo
            resident((1, O)),                          # bo
        ],
        out_specs=pl.BlockSpec((BB, O), lambda b, c: (b, 0)),
        scratch_shapes=[pltpu.VMEM((BB, Hp), jnp.float32),          # carried h
                        pltpu.VMEM((chunk_t * BB, Hp), jnp.float32)],  # u
    )
    return pl.pallas_call(
        _rnn_kernel,
        out_shape=jax.ShapeDtypeStruct((n_bblk * BB, O), jnp.float32),
        grid_spec=grid_spec,
        compiler_params=pltpu.CompilerParams(
            dimension_semantics=("parallel", "arbitrary"),  # batch ∥, time serial
            vmem_limit_bytes=vmem_limit),
        cost_estimate=cost,
    )


def rnn_forward(x, params, *, chunk_t=None, proj_dtype=jnp.float32,
                recur_dtype=jnp.float32, max_batch_block=256, pad_for_tpu=True):
    """x: (B, T, I) float32 (batch_first).  Returns (B, O) float32.

    proj_dtype : operand dtype of the (non-recurrent) input projection and the
                 output head (bf16 is MXU-friendly on v5e/v6e/v7x).
    recur_dtype: operand dtype of h @ Wh.  Kept f32 by default so the carried
                 hidden state is never re-quantized per step (matches PyTorch).
    """
    wx, bx, wh, bh, wo, bo = params
    B, T, I = x.shape
    H = wh.shape[0]
    O = wo.shape[1]

    # Fold the two biases once (hoisted out of the recurrence).
    bias = (bx + bh).astype(jnp.float32)
    bo = bo.astype(jnp.float32)

    # Hidden dim lane-dense (multiple of 128).  Zero padding is a no-op.
    Hp = _round_up(H, 128) if pad_for_tpu else H
    if Hp != H:
        wx = jnp.pad(wx, ((0, 0), (0, Hp - H)))
        bias = jnp.pad(bias, ((0, 0), (0, Hp - H)))
        wh = jnp.pad(wh, ((0, Hp - H), (0, Hp - H)))
        wo = jnp.pad(wo, ((0, Hp - H), (0, 0)))

    # Batch blocking: sublane-aligned blocks that (a) feed the MXU a decent
    # number of LHS rows per step and (b) expose a 'parallel' grid axis so
    # v7x's two TensorCores both get work for large B.
    Bp0 = _round_up(B, 8) if pad_for_tpu else B
    n_bblk = pl.cdiv(Bp0, max_batch_block)
    BB = _round_up(pl.cdiv(Bp0, n_bblk), 8)
    Bp = BB * n_bblk

    # Time-major x so each timestep inside a chunk is a leading-dim slice of
    # the projection scratch.  One XLA transpose, off the critical path.
    x_t = jnp.transpose(x, (1, 0, 2)).astype(proj_dtype)      # (T, B, I)
    if Bp != B:
        x_t = jnp.pad(x_t, ((0, 0), (0, Bp - B), (0, 0)))

    wx_mm = wx.astype(proj_dtype)
    wo_mm = wo.astype(proj_dtype)
    wh_mm = wh.astype(recur_dtype)

    cap = _vmem_capacity_bytes()
    if chunk_t is None:
        chunk_t = _pick_chunk_t(
            T, BB, I, Hp, O,
            proj_bytes=jnp.dtype(proj_dtype).itemsize,
            recur_bytes=jnp.dtype(recur_dtype).itemsize,
            vmem_budget=int(cap * 0.7))
    assert T % chunk_t == 0, "chunk_t must divide T"

    cost = pl.CostEstimate(
        flops=2 * Bp * T * I * Hp + 2 * Bp * T * Hp * Hp + 2 * Bp * Hp * O,
        transcendentals=Bp * T * Hp,
        bytes_accessed=(x_t.size * x_t.dtype.itemsize
                        + wx_mm.size * wx_mm.dtype.itemsize
                        + wh_mm.size * wh_mm.dtype.itemsize
                        + wo_mm.size * wo_mm.dtype.itemsize
                        + bias.size * 4 + bo.size * 4 + Bp * O * 4),
    )
    # Raise the scoped-VMEM limit toward physical capacity (v5e default is
    # only 16 MiB); stays within the per-core capacity on every generation.
    vmem_limit = max(int(cap * 0.9), 32 << 20)

    args = (x_t, wx_mm, bias, wh_mm, wo_mm, bo)
    call_kwargs = dict(T=T, I=I, O=O, Hp=Hp, BB=BB, n_bblk=n_bblk,
                       chunk_t=chunk_t, proj_dtype=proj_dtype,
                       recur_dtype=recur_dtype, vmem_limit=vmem_limit,
                       cost=cost)

    global _SINGLE_BUFFER_WEIGHTS_OK
    if _SINGLE_BUFFER_WEIGHTS_OK is None:
        # One-time probe: prefer single-buffered resident weights, but fall
        # back cleanly if this JAX build rejects pl.Buffered(1) on TPU.
        try:
            out = jax.block_until_ready(
                _make_rnn_call(single_buffer_weights=True, **call_kwargs)(*args))
            _SINGLE_BUFFER_WEIGHTS_OK = True
        except Exception:
            _SINGLE_BUFFER_WEIGHTS_OK = False
            out = _make_rnn_call(single_buffer_weights=False,
                                 **call_kwargs)(*args)
    else:
        out = _make_rnn_call(single_buffer_weights=_SINGLE_BUFFER_WEIGHTS_OK,
                             **call_kwargs)(*args)

    return out[:B]


def init_params(key, input_size, output_size, hidden_size):
    """Deterministic init matching the PyTorch module.

    h2h: identity weight, zero bias (RNNCell._init_weights).
    x2h / linear: uniform(-1/sqrt(fan_in), 1/sqrt(fan_in)) like nn.Linear.
    Weights stored pre-transposed as (in, out)."""
    k1, k2, k3, k4 = jax.random.split(key, 4)

    lim_x = 1.0 / jnp.sqrt(jnp.float32(input_size))
    wx = jax.random.uniform(k1, (input_size, hidden_size), jnp.float32, -lim_x, lim_x)
    bx = jax.random.uniform(k2, (1, hidden_size), jnp.float32, -lim_x, lim_x)

    wh = jnp.eye(hidden_size, dtype=jnp.float32)      # nn.init.eye_
    bh = jnp.zeros((1, hidden_size), jnp.float32)     # nn.init.constant_ 0.0

    lim_h = 1.0 / jnp.sqrt(jnp.float32(hidden_size))
    wo = jax.random.uniform(k3, (hidden_size, output_size), jnp.float32, -lim_h, lim_h)
    bo = jax.random.uniform(k4, (1, output_size), jnp.float32, -lim_h, lim_h)

    return (wx, bx, wh, bh, wo, bo)


def rnn_reference(x, params, proj_dtype=jnp.float32, recur_dtype=jnp.float32):
    """Pure-JAX reference emulating the kernel's per-matmul operand dtypes."""
    wx, bx, wh, bh, wo, bo = params
    B, T, _ = x.shape
    H = wh.shape[0]
    bias = (bx + bh).astype(jnp.float32)
    h = jnp.zeros((B, H), jnp.float32)
    for t in range(T):
        u = (jnp.dot(x[:, t, :].astype(proj_dtype), wx.astype(proj_dtype),
                     preferred_element_type=jnp.float32) + bias)
        pre = jnp.dot(h.astype(recur_dtype), wh.astype(recur_dtype),
                      preferred_element_type=jnp.float32) + u
        h = jnp.tanh(pre)
    return (jnp.dot(h.astype(proj_dtype), wo.astype(proj_dtype),
                    preferred_element_type=jnp.float32) + bo)


if __name__ == "__main__":
    # seq=16 so the grid actually streams two chunks of 8 (exercises the
    # carried-h / pipelined-x path); everything else stays small.
    B, T, I, H, O = 2, 16, 4, 32, 8

    key = jax.random.PRNGKey(0)
    kx, kp, kb = jax.random.split(key, 3)
    x = jax.random.normal(kx, (B, T, I), jnp.float32)
    params = init_params(kp, input_size=I, output_size=O, hidden_size=H)

    ref = rnn_reference(x, params)

    # 1) f32 path, two time chunks (static-unroll recurrence) — tight check.
    out_a = jax.block_until_ready(rnn_forward(x, params, chunk_t=8))
    assert out_a.shape == (B, O)
    assert jnp.allclose(out_a, ref, atol=1e-4, rtol=1e-4), \
        float(jnp.max(jnp.abs(out_a - ref)))

    # 2) f32 path, one 16-step chunk (exercises the bounded-unroll fori path).
    out_b = jax.block_until_ready(rnn_forward(x, params, chunk_t=16))
    assert jnp.allclose(out_b, ref, atol=1e-4, rtol=1e-4), \
        float(jnp.max(jnp.abs(out_b - ref)))

    # 3) bf16 input-projection path (recurrence stays f32, matching PyTorch's
    #    f32 hidden state) vs. a reference emulating the same operand dtypes.
    out_c = jax.block_until_ready(
        rnn_forward(x, params, proj_dtype=jnp.bfloat16))
    ref_c = rnn_reference(x, params, proj_dtype=jnp.bfloat16)
    assert jnp.allclose(out_c, ref_c, atol=2e-3, rtol=2e-3), \
        float(jnp.max(jnp.abs(out_c - ref_c)))

    # 4) Multi-batch-block path: 3 batch blocks on the leading 'parallel' grid
    #    axis (per-block h re-init / finalize).
    xb = jax.random.normal(kb, (24, T, I), jnp.float32)
    out_d = jax.block_until_ready(
        rnn_forward(xb, params, chunk_t=8, max_batch_block=8))
    ref_d = rnn_reference(xb, params)
    assert out_d.shape == (24, O)
    assert jnp.allclose(out_d, ref_d, atol=1e-4, rtol=1e-4), \
        float(jnp.max(jnp.abs(out_d - ref_d)))

    print("KERNEL_OK")
</pallas_src>

<mosaic_0001>
module attributes {stable_mosaic.version = 11 : i64} {
  func.func @_rnn_kernel(%arg0: i32, %arg1: i32, %arg2: memref<8x8x4xf32, #tpu.memory_space<vmem>>, %arg3: memref<4x128xf32, #tpu.memory_space<vmem>>, %arg4: memref<1x128xf32, #tpu.memory_space<vmem>>, %arg5: memref<128x128xf32, #tpu.memory_space<vmem>>, %arg6: memref<128x8xf32, #tpu.memory_space<vmem>>, %arg7: memref<1x8xf32, #tpu.memory_space<vmem>>, %arg8: memref<8x8xf32, #tpu.memory_space<vmem>>, %arg9: memref<8x128xf32, #tpu.memory_space<vmem>>, %arg10: memref<64x128xf32, #tpu.memory_space<vmem>>) attributes {dimension_semantics = [#tpu.dimension_semantics<parallel>, #tpu.dimension_semantics<arbitrary>], iteration_bounds = array<i64: 1, 2>, scalar_prefetch = 0 : i64, scratch_operands = 2 : i64, tpu.core_type = #tpu.core_type<tc>, window_params = [{transform_indices = @transform_0, window_bounds = array<i64: 8, 8, 4>}, {pipeline_mode = #tpu.pipeline_mode<synchronous>, transform_indices = @transform_1, window_bounds = array<i64: 4, 128>}, {pipeline_mode = #tpu.pipeline_mode<synchronous>, transform_indices = @transform_2, window_bounds = array<i64: 1, 128>}, {pipeline_mode = #tpu.pipeline_mode<synchronous>, transform_indices = @transform_3, window_bounds = array<i64: 128, 128>}, {pipeline_mode = #tpu.pipeline_mode<synchronous>, transform_indices = @transform_4, window_bounds = array<i64: 128, 8>}, {pipeline_mode = #tpu.pipeline_mode<synchronous>, transform_indices = @transform_5, window_bounds = array<i64: 1, 8>}, {transform_indices = @transform_6, window_bounds = array<i64: 8, 8>}]} {
    %c0_i32 = arith.constant 0 : i32
    %0 = arith.cmpi eq, %arg1, %c0_i32 : i32
    %1 = arith.extui %0 : i1 to i32
    %c0_i32_0 = arith.constant 0 : i32
    %2 = arith.cmpi ne, %1, %c0_i32_0 : i32
    scf.if %2 {
      %cst_33 = arith.constant 0.000000e+00 : f32
      %49 = vector.broadcast %cst_33 : f32 to vector<8x128xf32>
      %c0_34 = arith.constant 0 : index
      %c0_35 = arith.constant 0 : index
      %50 = vector.load %arg9[%c0_34, %c0_35] : memref<8x128xf32, #tpu.memory_space<vmem>>, vector<8x128xf32>
      tpu.vector_store %arg9[%c0_34, %c0_35], %49 {strides = array<i32>} : memref<8x128xf32, #tpu.memory_space<vmem>>, vector<8x128xf32>,
    } else {
    }
    %c0 = arith.constant 0 : index
    %c0_1 = arith.constant 0 : index
    %c0_2 = arith.constant 0 : index
    %3 = vector.load %arg2[%c0, %c0_1, %c0_2] : memref<8x8x4xf32, #tpu.memory_space<vmem>>, vector<8x8x4xf32>
    %4 = vector.shape_cast %3 : vector<8x8x4xf32> to vector<64x4xf32>
    %c0_3 = arith.constant 0 : index
    %c0_4 = arith.constant 0 : index
    %5 = vector.load %arg3[%c0_3, %c0_4] : memref<4x128xf32, #tpu.memory_space<vmem>>, vector<4x128xf32>
    %cst = arith.constant dense<0.000000e+00> : vector<64x128xf32>
    %6 = tpu.matmul %4, %5, %cst {dimension_numbers = #tpu.dot_dimension_numbers<[1], [0], [0], [1], [0, 0, 1, 1], [], []>} : vector<64x4xf32>, vector<4x128xf32>, vector<64x128xf32> -> vector<64x128xf32>
    %c0_5 = arith.constant 0 : index
    %c0_6 = arith.constant 0 : index
    %7 = vector.load %arg4[%c0_5, %c0_6] : memref<1x128xf32, #tpu.memory_space<vmem>>, vector<1x128xf32>
    %8 = vector.broadcast %7 : vector<1x128xf32> to vector<64x128xf32>
    %9 = arith.addf %6, %8 : vector<64x128xf32>
    %c0_7 = arith.constant 0 : index
    %c0_8 = arith.constant 0 : index
    %10 = vector.load %arg10[%c0_7, %c0_8] : memref<64x128xf32, #tpu.memory_space<vmem>>, vector<64x128xf32>
    tpu.vector_store %arg10[%c0_7, %c0_8], %9 {strides = array<i32>} : memref<64x128xf32, #tpu.memory_space<vmem>>, vector<64x128xf32>,
    %c0_9 = arith.constant 0 : index
    %c0_10 = arith.constant 0 : index
    %11 = vector.load %arg5[%c0_9, %c0_10] : memref<128x128xf32, #tpu.memory_space<vmem>>, vector<128x128xf32>
    %c0_11 = arith.constant 0 : index
    %c0_12 = arith.constant 0 : index
    %12 = vector.load %arg9[%c0_11, %c0_12] : memref<8x128xf32, #tpu.memory_space<vmem>>, vector<8x128xf32>
    %c0_13 = arith.constant 0 : index
    %c0_14 = arith.constant 0 : index
    %13 = vector.load %arg10[%c0_13, %c0_14] : memref<64x128xf32, #tpu.memory_space<vmem>>, vector<8x128xf32>
    %cst_15 = arith.constant dense<0.000000e+00> : vector<8x128xf32>
    %14 = tpu.matmul %12, %11, %cst_15 {dimension_numbers = #tpu.dot_dimension_numbers<[1], [0], [0], [1], [0, 0, 1, 1], [], []>} : vector<8x128xf32>, vector<128x128xf32>, vector<8x128xf32> -> vector<8x128xf32>
    %15 = arith.addf %14, %13 : vector<8x128xf32>
    %16 = math.tanh %15 : vector<8x128xf32>
    %c8 = arith.constant 8 : index
    %c0_16 = arith.constant 0 : index
    %17 = vector.load %arg10[%c8, %c0_16] : memref<64x128xf32, #tpu.memory_space<vmem>>, vector<8x128xf32>
    %cst_17 = arith.constant dense<0.000000e+00> : vector<8x128xf32>
    %18 = tpu.matmul %16, %11, %cst_17 {dimension_numbers = #tpu.dot_dimension_numbers<[1], [0], [0], [1], [0, 0, 1, 1], [], []>} : vector<8x128xf32>, vector<128x128xf32>, vector<8x128xf32> -> vector<8x128xf32>
    %19 = arith.addf %18, %17 : vector<8x128xf32>
    %20 = math.tanh %19 : vector<8x128xf32>
    %c16 = arith.constant 16 : index
    %c0_18 = arith.constant 0 : index
    %21 = vector.load %arg10[%c16, %c0_18] : memref<64x128xf32, #tpu.memory_space<vmem>>, vector<8x128xf32>
    %cst_19 = arith.constant dense<0.000000e+00> : vector<8x128xf32>
    %22 = tpu.matmul %20, %11, %cst_19 {dimension_numbers = #tpu.dot_dimension_numbers<[1], [0], [0], [1], [0, 0, 1, 1], [], []>} : vector<8x128xf32>, vector<128x128xf32>, vector<8x128xf32> -> vector<8x128xf32>
    %23 = arith.addf %22, %21 : vector<8x128xf32>
    %24 = math.tanh %23 : vector<8x128xf32>
    %c24 = arith.constant 24 : index
    %c0_20 = arith.constant 0 : index
    %25 = vector.load %arg10[%c24, %c0_20] : memref<64x128xf32, #tpu.memory_space<vmem>>, vector<8x128xf32>
    %cst_21 = arith.constant dense<0.000000e+00> : vector<8x128xf32>
    %26 = tpu.matmul %24, %11, %cst_21 {dimension_numbers = #tpu.dot_dimension_numbers<[1], [0], [0], [1], [0, 0, 1, 1], [], []>} : vector<8x128xf32>, vector<128x128xf32>, vector<8x128xf32> -> vector<8x128xf32>
    %27 = arith.addf %26, %25 : vector<8x128xf32>
    %28 = math.tanh %27 : vector<8x128xf32>
    %c32 = arith.constant 32 : index
    %c0_22 = arith.constant 0 : index
    %29 = vector.load %arg10[%c32, %c0_22] : memref<64x128xf32, #tpu.memory_space<vmem>>, vector<8x128xf32>
    %cst_23 = arith.constant dense<0.000000e+00> : vector<8x128xf32>
    %30 = tpu.matmul %28, %11, %cst_23 {dimension_numbers = #tpu.dot_dimension_numbers<[1], [0], [0], [1], [0, 0, 1, 1], [], []>} : vector<8x128xf32>, vector<128x128xf32>, vector<8x128xf32> -> vector<8x128xf32>
    %31 = arith.addf %30, %29 : vector<8x128xf32>
    %32 = math.tanh %31 : vector<8x128xf32>
    %c40 = arith.constant 40 : index
    %c0_24 = arith.constant 0 : index
    %33 = vector.load %arg10[%c40, %c0_24] : memref<64x128xf32, #tpu.memory_space<vmem>>, vector<8x128xf32>
    %cst_25 = arith.constant dense<0.000000e+00> : vector<8x128xf32>
    %34 = tpu.matmul %32, %11, %cst_25 {dimension_numbers = #tpu.dot_dimension_numbers<[1], [0], [0], [1], [0, 0, 1, 1], [], []>} : vector<8x128xf32>, vector<128x128xf32>, vector<8x128xf32> -> vector<8x128xf32>
    %35 = arith.addf %34, %33 : vector<8x128xf32>
    %36 = math.tanh %35 : vector<8x128xf32>
    %c48 = arith.constant 48 : index
    %c0_26 = arith.constant 0 : index
    %37 = vector.load %arg10[%c48, %c0_26] : memref<64x128xf32, #tpu.memory_space<vmem>>, vector<8x128xf32>
    %cst_27 = arith.constant dense<0.000000e+00> : vector<8x128xf32>
    %38 = tpu.matmul %36, %11, %cst_27 {dimension_numbers = #tpu.dot_dimension_numbers<[1], [0], [0], [1], [0, 0, 1, 1], [], []>} : vector<8x128xf32>, vector<128x128xf32>, vector<8x128xf32> -> vector<8x128xf32>
    %39 = arith.addf %38, %37 : vector<8x128xf32>
    %40 = math.tanh %39 : vector<8x128xf32>
    %c56 = arith.constant 56 : index
    %c0_28 = arith.constant 0 : index
    %41 = vector.load %arg10[%c56, %c0_28] : memref<64x128xf32, #tpu.memory_space<vmem>>, vector<8x128xf32>
    %cst_29 = arith.constant dense<0.000000e+00> : vector<8x128xf32>
    %42 = tpu.matmul %40, %11, %cst_29 {dimension_numbers = #tpu.dot_dimension_numbers<[1], [0], [0], [1], [0, 0, 1, 1], [], []>} : vector<8x128xf32>, vector<128x128xf32>, vector<8x128xf32> -> vector<8x128xf32>
    %43 = arith.addf %42, %41 : vector<8x128xf32>
    %44 = math.tanh %43 : vector<8x128xf32>
    %c0_30 = arith.constant 0 : index
    %c0_31 = arith.constant 0 : index
    %45 = vector.load %arg9[%c0_30, %c0_31] : memref<8x128xf32, #tpu.memory_space<vmem>>, vector<8x128xf32>
    tpu.vector_store %arg9[%c0_30, %c0_31], %44 {strides = array<i32>} : memref<8x128xf32, #tpu.memory_space<vmem>>, vector<8x128xf32>,
    %c1_i32 = arith.constant 1 : i32
    %46 = arith.cmpi eq, %arg1, %c1_i32 : i32
    %47 = arith.extui %46 : i1 to i32
    %c0_i32_32 = arith.constant 0 : i32
    %48 = arith.cmpi ne, %47, %c0_i32_32 : i32
    scf.if %48 {
      %c0_33 = arith.constant 0 : index
      %c0_34 = arith.constant 0 : index
      %49 = vector.load %arg6[%c0_33, %c0_34] : memref<128x8xf32, #tpu.memory_space<vmem>>, vector<128x8xf32>
      %cst_35 = arith.constant dense<0.000000e+00> : vector<8x8xf32>
      %50 = tpu.matmul %44, %49, %cst_35 {dimension_numbers = #tpu.dot_dimension_numbers<[1], [0], [0], [1], [0, 0, 1, 1], [], []>} : vector<8x128xf32>, vector<128x8xf32>, vector<8x8xf32> -> vector<8x8xf32>
      %c0_36 = arith.constant 0 : index
      %c0_37 = arith.constant 0 : index
      %51 = vector.load %arg7[%c0_36, %c0_37] : memref<1x8xf32, #tpu.memory_space<vmem>>, vector<1x8xf32>
      %52 = vector.broadcast %51 : vector<1x8xf32> to vector<8x8xf32>
      %53 = arith.addf %50, %52 : vector<8x8xf32>
      %c0_38 = arith.constant 0 : index
      %c0_39 = arith.constant 0 : index
      %54 = vector.load %arg8[%c0_38, %c0_39] : memref<8x8xf32, #tpu.memory_space<vmem>>, vector<8x8xf32>
      tpu.vector_store %arg8[%c0_38, %c0_39], %53 {strides = array<i32>} : memref<8x8xf32, #tpu.memory_space<vmem>>, vector<8x8xf32>,
    } else {
    }
    return
  }
  func.func @transform_0(%arg0: i32, %arg1: i32) -> (i32, i32, i32) {
    %c0_i32 = arith.constant 0 : i32
    %c0_i32_0 = arith.constant 0 : i32
    return %arg1, %arg0, %c0_i32 : i32, i32, i32
  }
  func.func @transform_1(%arg0: i32, %arg1: i32) -> (i32, i32) {
    %c0_i32 = arith.constant 0 : i32
    %c0_i32_0 = arith.constant 0 : i32
    %c0_i32_1 = arith.constant 0 : i32
    return %c0_i32, %c0_i32_0 : i32, i32
  }
  func.func @transform_2(%arg0: i32, %arg1: i32) -> (i32, i32) {
    %c0_i32 = arith.constant 0 : i32
    %c0_i32_0 = arith.constant 0 : i32
    %c0_i32_1 = arith.constant 0 : i32
    return %c0_i32, %c0_i32_0 : i32, i32
  }
  func.func @transform_3(%arg0: i32, %arg1: i32) -> (i32, i32) {
    %c0_i32 = arith.constant 0 : i32
    %c0_i32_0 = arith.constant 0 : i32
    %c0_i32_1 = arith.constant 0 : i32
    return %c0_i32, %c0_i32_0 : i32, i32
  }
  func.func @transform_4(%arg0: i32, %arg1: i32) -> (i32, i32) {
    %c0_i32 = arith.constant 0 : i32
    %c0_i32_0 = arith.constant 0 : i32
    %c0_i32_1 = arith.constant 0 : i32
    return %c0_i32, %c0_i32_0 : i32, i32
  }
  func.func @transform_5(%arg0: i32, %arg1: i32) -> (i32, i32) {
    %c0_i32 = arith.constant 0 : i32
    %c0_i32_0 = arith.constant 0 : i32
    %c0_i32_1 = arith.constant 0 : i32
    return %c0_i32, %c0_i32_0 : i32, i32
  }
  func.func @transform_6(%arg0: i32, %arg1: i32) -> (i32, i32) {
    %c0_i32 = arith.constant 0 : i32
    %c0_i32_0 = arith.constant 0 : i32
    return %arg0, %c0_i32 : i32, i32
  }
}

module attributes {stable_mosaic.version = 11 : i64} {
  func.func @_rnn_kernel(%arg0: i32, %arg1: i32, %arg2: memref<8x8x4xf32, #tpu.memory_space<vmem>>, %arg3: memref<4x128xf32, #tpu.memory_space<vmem>>, %arg4: memref<1x128xf32, #tpu.memory_space<vmem>>, %arg5: memref<128x128xf32, #tpu.memory_space<vmem>>, %arg6: memref<128x8xf32, #tpu.memory_space<vmem>>, %arg7: memref<1x8xf32, #tpu.memory_space<vmem>>, %arg8: memref<8x8xf32, #tpu.memory_space<vmem>>, %arg9: memref<8x128xf32, #tpu.memory_space<vmem>>, %arg10: memref<64x128xf32, #tpu.memory_space<vmem>>) attributes {dimension_semantics = [#tpu.dimension_semantics<parallel>, #tpu.dimension_semantics<arbitrary>], iteration_bounds = array<i64: 1, 2>, scalar_prefetch = 0 : i64, scratch_operands = 2 : i64, tpu.core_type = #tpu.core_type<tc>, window_params = [{transform_indices = @transform_0, window_bounds = array<i64: 8, 8, 4>}, {pipeline_mode = #tpu.pipeline_mode<synchronous>, transform_indices = @transform_1, window_bounds = array<i64: 4, 128>}, {pipeline_mode = #tpu.pipeline_mode<synchronous>, transform_indices = @transform_2, window_bounds = array<i64: 1, 128>}, {pipeline_mode = #tpu.pipeline_mode<synchronous>, transform_indices = @transform_3, window_bounds = array<i64: 128, 128>}, {pipeline_mode = #tpu.pipeline_mode<synchronous>, transform_indices = @transform_4, window_bounds = array<i64: 128, 8>}, {pipeline_mode = #tpu.pipeline_mode<synchronous>, transform_indices = @transform_5, window_bounds = array<i64: 1, 8>}, {transform_indices = @transform_6, window_bounds = array<i64: 8, 8>}]} {
    %c0_i32 = arith.constant 0 : i32
    %0 = arith.cmpi eq, %arg1, %c0_i32 : i32
    %1 = arith.extui %0 : i1 to i32
    %c0_i32_0 = arith.constant 0 : i32
    %2 = arith.cmpi ne, %1, %c0_i32_0 : i32
    scf.if %2 {
      %cst_33 = arith.constant 0.000000e+00 : f32
      %49 = vector.broadcast %cst_33 : f32 to vector<8x128xf32>
      %c0_34 = arith.constant 0 : index
      %c0_35 = arith.constant 0 : index
      %50 = vector.load %arg9[%c0_34, %c0_35] : memref<8x128xf32, #tpu.memory_space<vmem>>, vector<8x128xf32>
      tpu.vector_store %arg9[%c0_34, %c0_35], %49 {strides = array<i32>} : memref<8x128xf32, #tpu.memory_space<vmem>>, vector<8x128xf32>,
    } else {
    }
    %c0 = arith.constant 0 : index
    %c0_1 = arith.constant 0 : index
    %c0_2 = arith.constant 0 : index
    %3 = vector.load %arg2[%c0, %c0_1, %c0_2] : memref<8x8x4xf32, #tpu.memory_space<vmem>>, vector<8x8x4xf32>
    %4 = vector.shape_cast %3 : vector<8x8x4xf32> to vector<64x4xf32>
    %c0_3 = arith.constant 0 : index
    %c0_4 = arith.constant 0 : index
    %5 = vector.load %arg3[%c0_3, %c0_4] : memref<4x128xf32, #tpu.memory_space<vmem>>, vector<4x128xf32>
    %cst = arith.constant dense<0.000000e+00> : vector<64x128xf32>
    %6 = tpu.matmul %4, %5, %cst {dimension_numbers = #tpu.dot_dimension_numbers<[1], [0], [0], [1], [0, 0, 1, 1], [], []>} : vector<64x4xf32>, vector<4x128xf32>, vector<64x128xf32> -> vector<64x128xf32>
    %c0_5 = arith.constant 0 : index
    %c0_6 = arith.constant 0 : index
    %7 = vector.load %arg4[%c0_5, %c0_6] : memref<1x128xf32, #tpu.memory_space<vmem>>, vector<1x128xf32>
    %8 = vector.broadcast %7 : vector<1x128xf32> to vector<64x128xf32>
    %9 = arith.addf %6, %8 : vector<64x128xf32>
    %c0_7 = arith.constant 0 : index
    %c0_8 = arith.constant 0 : index
    %10 = vector.load %arg10[%c0_7, %c0_8] : memref<64x128xf32, #tpu.memory_space<vmem>>, vector<64x128xf32>
    tpu.vector_store %arg10[%c0_7, %c0_8], %9 {strides = array<i32>} : memref<64x128xf32, #tpu.memory_space<vmem>>, vector<64x128xf32>,
    %c0_9 = arith.constant 0 : index
    %c0_10 = arith.constant 0 : index
    %11 = vector.load %arg5[%c0_9, %c0_10] : memref<128x128xf32, #tpu.memory_space<vmem>>, vector<128x128xf32>
    %c0_11 = arith.constant 0 : index
    %c0_12 = arith.constant 0 : index
    %12 = vector.load %arg9[%c0_11, %c0_12] : memref<8x128xf32, #tpu.memory_space<vmem>>, vector<8x128xf32>
    %c0_13 = arith.constant 0 : index
    %c0_14 = arith.constant 0 : index
    %13 = vector.load %arg10[%c0_13, %c0_14] : memref<64x128xf32, #tpu.memory_space<vmem>>, vector<8x128xf32>
    %cst_15 = arith.constant dense<0.000000e+00> : vector<8x128xf32>
    %14 = tpu.matmul %12, %11, %cst_15 {dimension_numbers = #tpu.dot_dimension_numbers<[1], [0], [0], [1], [0, 0, 1, 1], [], []>} : vector<8x128xf32>, vector<128x128xf32>, vector<8x128xf32> -> vector<8x128xf32>
    %15 = arith.addf %14, %13 : vector<8x128xf32>
    %16 = math.tanh %15 : vector<8x128xf32>
    %c8 = arith.constant 8 : index
    %c0_16 = arith.constant 0 : index
    %17 = vector.load %arg10[%c8, %c0_16] : memref<64x128xf32, #tpu.memory_space<vmem>>, vector<8x128xf32>
    %cst_17 = arith.constant dense<0.000000e+00> : vector<8x128xf32>
    %18 = tpu.matmul %16, %11, %cst_17 {dimension_numbers = #tpu.dot_dimension_numbers<[1], [0], [0], [1], [0, 0, 1, 1], [], []>} : vector<8x128xf32>, vector<128x128xf32>, vector<8x128xf32> -> vector<8x128xf32>
    %19 = arith.addf %18, %17 : vector<8x128xf32>
    %20 = math.tanh %19 : vector<8x128xf32>
    %c16 = arith.constant 16 : index
    %c0_18 = arith.constant 0 : index
    %21 = vector.load %arg10[%c16, %c0_18] : memref<64x128xf32, #tpu.memory_space<vmem>>, vector<8x128xf32>
    %cst_19 = arith.constant dense<0.000000e+00> : vector<8x128xf32>
    %22 = tpu.matmul %20, %11, %cst_19 {dimension_numbers = #tpu.dot_dimension_numbers<[1], [0], [0], [1], [0, 0, 1, 1], [], []>} : vector<8x128xf32>, vector<128x128xf32>, vector<8x128xf32> -> vector<8x128xf32>
    %23 = arith.addf %22, %21 : vector<8x128xf32>
    %24 = math.tanh %23 : vector<8x128xf32>
    %c24 = arith.constant 24 : index
    %c0_20 = arith.constant 0 : index
    %25 = vector.load %arg10[%c24, %c0_20] : memref<64x128xf32, #tpu.memory_space<vmem>>, vector<8x128xf32>
    %cst_21 = arith.constant dense<0.000000e+00> : vector<8x128xf32>
    %26 = tpu.matmul %24, %11, %cst_21 {dimension_numbers = #tpu.dot_dimension_numbers<[1], [0], [0], [1], [0, 0, 1, 1], [], []>} : vector<8x128xf32>, vector<128x128xf32>, vector<8x128xf32> -> vector<8x128xf32>
    %27 = arith.addf %26, %25 : vector<8x128xf32>
    %28 = math.tanh %27 : vector<8x128xf32>
    %c32 = arith.constant 32 : index
    %c0_22 = arith.constant 0 : index
    %29 = vector.load %arg10[%c32, %c0_22] : memref<64x128xf32, #tpu.memory_space<vmem>>, vector<8x128xf32>
    %cst_23 = arith.constant dense<0.000000e+00> : vector<8x128xf32>
    %30 = tpu.matmul %28, %11, %cst_23 {dimension_numbers = #tpu.dot_dimension_numbers<[1], [0], [0], [1], [0, 0, 1, 1], [], []>} : vector<8x128xf32>, vector<128x128xf32>, vector<8x128xf32> -> vector<8x128xf32>
    %31 = arith.addf %30, %29 : vector<8x128xf32>
    %32 = math.tanh %31 : vector<8x128xf32>
    %c40 = arith.constant 40 : index
    %c0_24 = arith.constant 0 : index
    %33 = vector.load %arg10[%c40, %c0_24] : memref<64x128xf32, #tpu.memory_space<vmem>>, vector<8x128xf32>
    %cst_25 = arith.constant dense<0.000000e+00> : vector<8x128xf32>
    %34 = tpu.matmul %32, %11, %cst_25 {dimension_numbers = #tpu.dot_dimension_numbers<[1], [0], [0], [1], [0, 0, 1, 1], [], []>} : vector<8x128xf32>, vector<128x128xf32>, vector<8x128xf32> -> vector<8x128xf32>
    %35 = arith.addf %34, %33 : vector<8x128xf32>
    %36 = math.tanh %35 : vector<8x128xf32>
    %c48 = arith.constant 48 : index
    %c0_26 = arith.constant 0 : index
    %37 = vector.load %arg10[%c48, %c0_26] : memref<64x128xf32, #tpu.memory_space<vmem>>, vector<8x128xf32>
    %cst_27 = arith.constant dense<0.000000e+00> : vector<8x128xf32>
    %38 = tpu.matmul %36, %11, %cst_27 {dimension_numbers = #tpu.dot_dimension_numbers<[1], [0], [0], [1], [0, 0, 1, 1], [], []>} : vector<8x128xf32>, vector<128x128xf32>, vector<8x128xf32> -> vector<8x128xf32>
    %39 = arith.addf %38, %37 : vector<8x128xf32>
    %40 = math.tanh %39 : vector<8x128xf32>
    %c56 = arith.constant 56 : index
    %c0_28 = arith.constant 0 : index
    %41 = vector.load %arg10[%c56, %c0_28] : memref<64x128xf32, #tpu.memory_space<vmem>>, vector<8x128xf32>
    %cst_29 = arith.constant dense<0.000000e+00> : vector<8x128xf32>
    %42 = tpu.matmul %40, %11, %cst_29 {dimension_numbers = #tpu.dot_dimension_numbers<[1], [0], [0], [1], [0, 0, 1, 1], [], []>} : vector<8x128xf32>, vector<128x128xf32>, vector<8x128xf32> -> vector<8x128xf32>
    %43 = arith.addf %42, %41 : vector<8x128xf32>
    %44 = math.tanh %43 : vector<8x128xf32>
    %c0_30 = arith.constant 0 : index
    %c0_31 = arith.constant 0 : index
    %45 = vector.load %arg9[%c0_30, %c0_31] : memref<8x128xf32, #tpu.memory_space<vmem>>, vector<8x128xf32>
    tpu.vector_store %arg9[%c0_30, %c0_31], %44 {strides = array<i32>} : memref<8x128xf32, #tpu.memory_space<vmem>>, vector<8x128xf32>,
    %c1_i32 = arith.constant 1 : i32
    %46 = arith.cmpi eq, %arg1, %c1_i32 : i32
    %47 = arith.extui %46 : i1 to i32
    %c0_i32_32 = arith.constant 0 : i32
    %48 = arith.cmpi ne, %47, %c0_i32_32 : i32
    scf.if %48 {
      %c0_33 = arith.constant 0 : index
      %c0_34 = arith.constant 0 : index
      %49 = vector.load %arg6[%c0_33, %c0_34] : memref<128x8xf32, #tpu.memory_space<vmem>>, vector<128x8xf32>
      %cst_35 = arith.constant dense<0.000000e+00> : vector<8x8xf32>
      %50 = tpu.matmul %44, %49, %cst_35 {dimension_numbers = #tpu.dot_dimension_numbers<[1], [0], [0], [1], [0, 0, 1, 1], [], []>} : vector<8x128xf32>, vector<128x8xf32>, vector<8x8xf32> -> vector<8x8xf32>
      %c0_36 = arith.constant 0 : index
      %c0_37 = arith.constant 0 : index
      %51 = vector.load %arg7[%c0_36, %c0_37] : memref<1x8xf32, #tpu.memory_space<vmem>>, vector<1x8xf32>
      %52 = vector.broadcast %51 : vector<1x8xf32> to vector<8x8xf32>
      %53 = arith.addf %50, %52 : vector<8x8xf32>
      %c0_38 = arith.constant 0 : index
      %c0_39 = arith.constant 0 : index
      %54 = vector.load %arg8[%c0_38, %c0_39] : memref<8x8xf32, #tpu.memory_space<vmem>>, vector<8x8xf32>
      tpu.vector_store %arg8[%c0_38, %c0_39], %53 {strides = array<i32>} : memref<8x8xf32, #tpu.memory_space<vmem>>, vector<8x8xf32>,
    } else {
    }
    return
  }
  func.func @transform_0(%arg0: i32, %arg1: i32) -> (i32, i32, i32) {
    %c0_i32 = arith.constant 0 : i32
    %c0_i32_0 = arith.constant 0 : i32
    return %arg1, %arg0, %c0_i32 : i32, i32, i32
  }
  func.func @transform_1(%arg0: i32, %arg1: i32) -> (i32, i32) {
    %c0_i32 = arith.constant 0 : i32
    %c0_i32_0 = arith.constant 0 : i32
    %c0_i32_1 = arith.constant 0 : i32
    return %c0_i32, %c0_i32_0 : i32, i32
  }
  func.func @transform_2(%arg0: i32, %arg1: i32) -> (i32, i32) {
    %c0_i32 = arith.constant 0 : i32
    %c0_i32_0 = arith.constant 0 : i32
    %c0_i32_1 = arith.constant 0 : i32
    return %c0_i32, %c0_i32_0 : i32, i32
  }
  func.func @transform_3(%arg0: i32, %arg1: i32) -> (i32, i32) {
    %c0_i32 = arith.constant 0 : i32
    %c0_i32_0 = arith.constant 0 : i32
    %c0_i32_1 = arith.constant 0 : i32
    return %c0_i32, %c0_i32_0 : i32, i32
  }
  func.func @transform_4(%arg0: i32, %arg1: i32) -> (i32, i32) {
    %c0_i32 = arith.constant 0 : i32
    %c0_i32_0 = arith.constant 0 : i32
    %c0_i32_1 = arith.constant 0 : i32
    return %c0_i32, %c0_i32_0 : i32, i32
  }
  func.func @transform_5(%arg0: i32, %arg1: i32) -> (i32, i32) {
    %c0_i32 = arith.constant 0 : i32
    %c0_i32_0 = arith.constant 0 : i32
    %c0_i32_1 = arith.constant 0 : i32
    return %c0_i32, %c0_i32_0 : i32, i32
  }
  func.func @transform_6(%arg0: i32, %arg1: i32) -> (i32, i32) {
    %c0_i32 = arith.constant 0 : i32
    %c0_i32_0 = arith.constant 0 : i32
    return %arg0, %c0_i32 : i32, i32
  }
}

</mosaic_0001>

<llo_original>
// kernel: tpu_custom_call.1
$region0: #{tpu_custom_call.1}
  #allocation0 [shape = 'u32[]', space=smem, size = 0x4, offset = 0x4, fixed_abs, tag = 'smem constant byte address 0x4 - core index']
  #allocation1 [shape = 'u32[144,128]{1,0:T(1,128)}', space=vmem, size = 0x12000, scoped, tag = 'internal scratch']
  #allocation2 [shape = 'f32[8,128]{1,0:T(8,128)}', space=vmem, size = 0x1000, scoped, tag = 'scratch operand']
  #allocation3 [shape = 'f32[64,128]{1,0:T(8,128)}', space=vmem, size = 0x8000, scoped, tag = 'scratch operand']
  %s0 = inlined_call_operand.vmem [shape: f32[16,8,4], index: 0, kind: input, shape index: {}]
  %s1 = inlined_call_operand.vmem [shape: f32[4,128], index: 1, kind: input, shape index: {}]
  %s2 = inlined_call_operand.vmem [shape: f32[1,128], index: 2, kind: input, shape index: {}]
  %s3 = inlined_call_operand.vmem [shape: f32[128,128], index: 3, kind: input, shape index: {}]
  %s4 = inlined_call_operand.vmem [shape: f32[128,8], index: 4, kind: input, shape index: {}]
  %s5 = inlined_call_operand.vmem [shape: f32[1,8], index: 5, kind: input, shape index: {}]
  %s6 = inlined_call_operand.hbm [shape: f32[8,8], index: 6, kind: output, shape index: {}]
  %s7 = sld [smem:[#allocation0]]
  $region65: #{tpu_custom_call.1} parent=0
    _
  %s9 = ssub.s32 1, %s7
  %s10 = scalar_select 0, %s9, %s7
  $region1: #{tpu_custom_call.1} parent=0
    #allocation4 [shape = 'u8[4096]{0}', space=vmem, size = 0x1000, scoped, tag = 'output window, operand 0, single buffered']
    #allocation5 [shape = 's32[2]{0}', space=sflag, size = 0x8, scoped, tag = 'scoped memory for tpu_custom_call.1']
    %11 = vsyncpa [#allocation5], 0
    loop: start=0, step=1, limit=4
    $region2: #{tpu_custom_call.1} parent=1 // loop_pre_header
      _
    $region3: #{tpu_custom_call.1} parent=1 // loop_header
      %s13 = sphi 0, %s17
      %p14 = scmp.ge.s32.totalorder %s13, 4
      %s20 = sphi 0, %s32
      %s21 = sphi 0, %s28
      %s22 = sphi 0, %s20
      %s23 = sphi 0, %s21
      %s24 = sphi 0, %s22
      %s25 = sphi 0, %s23
      %s37 = sphi 0, %s39
      %s40 = sphi 0, %s37
      %s41 = sphi 0, %s40
      %s57 = sphi 0, %s41
      %s61 = sphi 0, %s61
      %s63 = sphi 0, %s61
      %s64 = sphi 0, %s63
      %s78 = sphi 0, %s64
      %s82 = sphi 0, %s82
      %s84 = sphi 0, %s82
      %s85 = sphi 0, %s84
      %s99 = sphi 0, %s85
      %s103 = sphi 0, %s103
      %s105 = sphi 0, %s103
      %s106 = sphi 0, %s105
      %s120 = sphi 0, %s106
      %s124 = sphi 0, %s124
      %s126 = sphi 0, %s124
      %s127 = sphi 0, %s126
      %s141 = sphi 0, %s127
      %s145 = sphi 0, %s145
      %s147 = sphi 0, %s145
      %s148 = sphi 0, %s147
      %s162 = sphi 0, %s148
      %s168 = sphi 0, %s170
      %s171 = sphi 0, %s168
      %s172 = sphi 0, %s171
      %s188 = sphi 0, %s172
    $region4: #{tpu_custom_call.1} parent=1 // loop_header_branch
      %16 = sbr.rel (%p14) target = $region8
    $region5: #{tpu_custom_call.1} parent=1 // loop_body
      %s18 = ssub.s32 %s13, 1
      %s19 = ssub.s32 %s13, 2
      %s26 = sadd.s32 1, %s21
      %p27 = scmp.ge.s32.totalorder %s26, 2
      %s28 = scalar_select %p27, 0, %s26
      %s29 = sadd.s32 1, %s20
      %s30 = scalar_select %p27, %s29, %s20
      %p31 = scmp.ge.s32.totalorder %s30, 1
      %s32 = scalar_select %p31, 0, %s30
      %s33 = ssub.s32 %s21, %s28
      %s34 = ssub.s32 %s20, %s32
      %s35 = sor.u32 %s33, %s34
      %p36 = scmp.eq.s32.totalorder %s35, 0
      %s38 = sadd.s32 %s37, 1
      %s39 = scalar_select %p36, %s37, %s38
      %p42 = pneg %p36
      %p43 = scmp.eq.s32.totalorder %s13, 1
      %p44 = por %p42, %p43
      %p45 = scmp.ne.s32.totalorder %s37, %s40
      %p46 = scmp.eq.s32.totalorder %s13, 0
      %p47 = por %p45, %p46
      %p48 = scmp.ne.s32.totalorder %s37, %s40
      %p49 = scmp.eq.s32.totalorder %s18, 1
      %p50 = por %p48, %p49
      %p51 = scmp.ne.s32.totalorder %s40, %s41
      %p52 = scmp.eq.s32.totalorder %s18, 0
      %p53 = por %p51, %p52
      %p54 = scmp.ne.s32.totalorder %s40, %s41
      %p55 = scmp.eq.s32.totalorder %s19, 1
      %p56 = por %p54, %p55
      %p58 = scmp.ne.s32.totalorder %s41, %s57
      %p59 = scmp.eq.s32.totalorder %s19, 0
      %p60 = por %p58, %p59
      %s62 = sadd.s32 %s61, 1
      %p65 = scmp.eq.s32.totalorder %s13, 1
      %p66 = scmp.ne.s32.totalorder %s61, %s63
      %p67 = scmp.eq.s32.totalorder %s13, 0
      %p68 = por %p66, %p67
      %p69 = scmp.ne.s32.totalorder %s61, %s63
      %p70 = scmp.eq.s32.totalorder %s18, 1
      %p71 = por %p69, %p70
      %p72 = scmp.ne.s32.totalorder %s63, %s64
      %p73 = scmp.eq.s32.totalorder %s18, 0
      %p74 = por %p72, %p73
      %p75 = scmp.ne.s32.totalorder %s63, %s64
      %p76 = scmp.eq.s32.totalorder %s19, 1
      %p77 = por %p75, %p76
      %p79 = scmp.ne.s32.totalorder %s64, %s78
      %p80 = scmp.eq.s32.totalorder %s19, 0
      %p81 = por %p79, %p80
      %s83 = sadd.s32 %s82, 1
      %p86 = scmp.eq.s32.totalorder %s13, 1
      %p87 = scmp.ne.s32.totalorder %s82, %s84
      %p88 = scmp.eq.s32.totalorder %s13, 0
      %p89 = por %p87, %p88
      %p90 = scmp.ne.s32.totalorder %s82, %s84
      %p91 = scmp.eq.s32.totalorder %s18, 1
      %p92 = por %p90, %p91
      %p93 = scmp.ne.s32.totalorder %s84, %s85
      %p94 = scmp.eq.s32.totalorder %s18, 0
      %p95 = por %p93, %p94
      %p96 = scmp.ne.s32.totalorder %s84, %s85
      %p97 = scmp.eq.s32.totalorder %s19, 1
      %p98 = por %p96, %p97
      %p100 = scmp.ne.s32.totalorder %s85, %s99
      %p101 = scmp.eq.s32.totalorder %s19, 0
      %p102 = por %p100, %p101
      %s104 = sadd.s32 %s103, 1
      %p107 = scmp.eq.s32.totalorder %s13, 1
      %p108 = scmp.ne.s32.totalorder %s103, %s105
      %p109 = scmp.eq.s32.totalorder %s13, 0
      %p110 = por %p108, %p109
      %p111 = scmp.ne.s32.totalorder %s103, %s105
      %p112 = scmp.eq.s32.totalorder %s18, 1
      %p113 = por %p111, %p112
      %p114 = scmp.ne.s32.totalorder %s105, %s106
      %p115 = scmp.eq.s32.totalorder %s18, 0
      %p116 = por %p114, %p115
      %p117 = scmp.ne.s32.totalorder %s105, %s106
      %p118 = scmp.eq.s32.totalorder %s19, 1
      %p119 = por %p117, %p118
      %p121 = scmp.ne.s32.totalorder %s106, %s120
      %p122 = scmp.eq.s32.totalorder %s19, 0
      %p123 = por %p121, %p122
      %s125 = sadd.s32 %s124, 1
      %p128 = scmp.eq.s32.totalorder %s13, 1
      %p129 = scmp.ne.s32.totalorder %s124, %s126
      %p130 = scmp.eq.s32.totalorder %s13, 0
      %p131 = por %p129, %p130
      %p132 = scmp.ne.s32.totalorder %s124, %s126
      %p133 = scmp.eq.s32.totalorder %s18, 1
      %p134 = por %p132, %p133
      %p135 = scmp.ne.s32.totalorder %s126, %s127
      %p136 = scmp.eq.s32.totalorder %s18, 0
      %p137 = por %p135, %p136
      %p138 = scmp.ne.s32.totalorder %s126, %s127
      %p139 = scmp.eq.s32.totalorder %s19, 1
      %p140 = por %p138, %p139
      %p142 = scmp.ne.s32.totalorder %s127, %s141
      %p143 = scmp.eq.s32.totalorder %s19, 0
      %p144 = por %p142, %p143
      %s146 = sadd.s32 %s145, 1
      %p149 = scmp.eq.s32.totalorder %s13, 1
      %p150 = scmp.ne.s32.totalorder %s145, %s147
      %p151 = scmp.eq.s32.totalorder %s13, 0
      %p152 = por %p150, %p151
      %p153 = scmp.ne.s32.totalorder %s145, %s147
      %p154 = scmp.eq.s32.totalorder %s18, 1
      %p155 = por %p153, %p154
      %p156 = scmp.ne.s32.totalorder %s147, %s148
      %p157 = scmp.eq.s32.totalorder %s18, 0
      %p158 = por %p156, %p157
      %p159 = scmp.ne.s32.totalorder %s147, %s148
      %p160 = scmp.eq.s32.totalorder %s19, 1
      %p161 = por %p159, %p160
      %p163 = scmp.ne.s32.totalorder %s148, %s162
      %p164 = scmp.eq.s32.totalorder %s19, 0
      %p165 = por %p163, %p164
      %s166 = ssub.s32 %s20, %s32
      %p167 = scmp.eq.s32.totalorder %s166, 0
      %s169 = sadd.s32 %s168, 1
      %s170 = scalar_select %p167, %s168, %s169
      %p173 = pneg %p167
      %p174 = scmp.eq.s32.totalorder %s13, 1
      %p175 = por %p173, %p174
      %p176 = scmp.ne.s32.totalorder %s168, %s171
      %p177 = scmp.eq.s32.totalorder %s13, 0
      %p178 = por %p176, %p177
      %p179 = scmp.ne.s32.totalorder %s168, %s171
      %p180 = scmp.eq.s32.totalorder %s18, 1
      %p181 = por %p179, %p180
      %p182 = scmp.ne.s32.totalorder %s171, %s172
      %p183 = scmp.eq.s32.totalorder %s18, 0
      %p184 = por %p182, %p183
      %p185 = scmp.ne.s32.totalorder %s171, %s172
      %p186 = scmp.eq.s32.totalorder %s19, 1
      %p187 = por %p185, %p186
      %p189 = scmp.ne.s32.totalorder %s172, %s188
      %p190 = scmp.eq.s32.totalorder %s19, 0
      %p191 = por %p189, %p190
      %p192 = scmp.le.s32.totalorder 1, %s13
      %p193 = scmp.lt.s32.totalorder %s13, 3
      %p194 = pnand %p192, %p193
      %p195 = pneg %p194
      // Predicated region
      $region9: #{tpu_custom_call.1} parent=5 // pred_check
        _
      $region10: #{tpu_custom_call.1} parent=5 // pred_check_branch
        %197 = sbr.rel (%p194) target = $region12
      $region11: #{tpu_custom_call.1} parent=5 // pred_region
        %s198 = ssub.s32 %s13, 1
        // Predicated region
        $region13: #{tpu_custom_call.1} parent=11 // pred_check
          %p199 = pneg %p74
        $region14: #{tpu_custom_call.1} parent=11 // pred_check_branch
          %201 = sbr.rel (%p199) target = $region16
        $region15: #{tpu_custom_call.1} parent=11 // pred_region
          _
        $region16: #{tpu_custom_call.1} parent=11 // pred_fallthru
          _
        // Predicated region
        $region17: #{tpu_custom_call.1} parent=11 // pred_check
          %p202 = pneg %p95
        $region18: #{tpu_custom_call.1} parent=11 // pred_check_branch
          %204 = sbr.rel (%p202) target = $region20
        $region19: #{tpu_custom_call.1} parent=11 // pred_region
          _
        $region20: #{tpu_custom_call.1} parent=11 // pred_fallthru
          _
        // Predicated region
        $region21: #{tpu_custom_call.1} parent=11 // pred_check
          %p205 = pneg %p116
        $region22: #{tpu_custom_call.1} parent=11 // pred_check_branch
          %207 = sbr.rel (%p205) target = $region24
        $region23: #{tpu_custom_call.1} parent=11 // pred_region
          _
        $region24: #{tpu_custom_call.1} parent=11 // pred_fallthru
          _
        // Predicated region
        $region25: #{tpu_custom_call.1} parent=11 // pred_check
          %p208 = pneg %p137
        $region26: #{tpu_custom_call.1} parent=11 // pred_check_branch
          %210 = sbr.rel (%p208) target = $region28
        $region27: #{tpu_custom_call.1} parent=11 // pred_region
          _
        $region28: #{tpu_custom_call.1} parent=11 // pred_fallthru
          _
        // Predicated region
        $region29: #{tpu_custom_call.1} parent=11 // pred_check
          %p211 = pneg %p158
        $region30: #{tpu_custom_call.1} parent=11 // pred_check_branch
          %213 = sbr.rel (%p211) target = $region32
        $region31: #{tpu_custom_call.1} parent=11 // pred_region
          _
        $region32: #{tpu_custom_call.1} parent=11 // pred_fallthru
          _
      $region12: #{tpu_custom_call.1} parent=5 // pred_fallthru
        _
      %p214 = scmp.lt.s32.totalorder %s13, 2
      // Predicated region
      $region33: #{tpu_custom_call.1} parent=5 // pred_check
        %p215 = pneg %p214
      $region34: #{tpu_custom_call.1} parent=5 // pred_check_branch
        %217 = sbr.rel (%p215) target = $region36
      $region35: #{tpu_custom_call.1} parent=5 // pred_region
        // Predicated region
        $region37: #{tpu_custom_call.1} parent=35 // pred_check
          %p218 = pneg %p47
        $region38: #{tpu_custom_call.1} parent=35 // pred_check_branch
          %220 = sbr.rel (%p218) target = $region40
        $region39: #{tpu_custom_call.1} parent=35 // pred_region
          %s221 = smul.u32 8, %s21
          %p222 = scmp.lt.s32.totalorder %s221, 15
          %s223 = scalar_select %p222, %s221, 15
          %p224 = scmp.lt.s32.totalorder %s20, 0
          %s225 = scalar_select %p224, %s20, 0
          %s226 = sadd.s32 %s225, %s223
          %s227 = smul.addr %s226, 8
          %s228 = scalar_lea.vmem %s0, %s227
          %s229 = smul.u32 8, %s21
        $region40: #{tpu_custom_call.1} parent=35 // pred_fallthru
          _
      $region36: #{tpu_custom_call.1} parent=5 // pred_fallthru
        _
      %p230 = scmp.le.s32.totalorder 1, %s13
      %p231 = scmp.lt.s32.totalorder %s13, 3
      %p232 = pnand %p230, %p231
      %p233 = pneg %p232
      // Predicated region
      $region41: #{tpu_custom_call.1} parent=5 // pred_check
        _
      $region42: #{tpu_custom_call.1} parent=5 // pred_check_branch
        %235 = sbr.rel (%p232) target = $region44
      $region43: #{tpu_custom_call.1} parent=5 // pred_region
        %s236 = ssub.s32 %s13, 1
        %s237 = smul.u32 8, %s23
        %p238 = scmp.lt.s32.totalorder %s237, 15
        %s239 = scalar_select %p238, %s237, 15
        %p240 = scmp.lt.s32.totalorder %s22, 0
        %s241 = scalar_select %p240, %s22, 0
        %s242 = sadd.s32 %s241, %s239
        %s243 = smul.addr %s242, 8
        %s244 = scalar_lea.vmem %s0, %s243
        %p245 = pneg %p53
        %p246 = pneg %p50
        %p247 = pneg %p74
        %p248 = pneg %p71
        %p249 = pneg %p95
        %p250 = pneg %p92
        %p251 = pneg %p116
        %p252 = pneg %p113
        %p253 = pneg %p137
        %p254 = pneg %p134
        %p255 = pneg %p158
        %p256 = pneg %p155
        %p257 = pneg %p184
        %p258 = pneg %p181
        %s259 = smul.u32 8, %s23
        %p260 = scmp.lt.s32.totalorder %s259, 15
        %s261 = scalar_select %p260, %s259, 15
        %p262 = scmp.lt.s32.totalorder %s22, 0
        %s263 = scalar_select %p262, %s22, 0
        %s264 = sadd.s32 %s263, %s261
        %s265 = smul.addr %s264, 8
        %s266 = scalar_lea.vmem %s0, %s265
        %s267 = smul.u32 8, %s23
        %p268 = scmp.eq.s32.totalorder %s23, 0
        // Predicated region
        $region45: #{tpu_custom_call.1} parent=43 // pred_check
          %p269 = pneg %p268
        $region46: #{tpu_custom_call.1} parent=43 // pred_check_branch
          %271 = sbr.rel (%p269) target = $region48
        $region47: #{tpu_custom_call.1} parent=43 // pred_region
          %272 = vst [vmem:[#allocation2] sm:$0xff] 0.0
        $region48: #{tpu_custom_call.1} parent=43 // pred_fallthru
          _
        %v273 = vld [vmem:[%s266] sm:$0xff]
        %v274 = vld [vmem:[%s266 + $0x8] sm:$0xff]
        %v275 = vld [vmem:[%s266 + $0x10] sm:$0xff]
        %v276 = vld [vmem:[%s266 + $0x18] sm:$0xff]
        %v277 = vld [vmem:[%s266 + $0x20] sm:$0xff]
        %v278 = vld [vmem:[%s266 + $0x28] sm:$0xff]
        %v279 = vld [vmem:[%s266 + $0x30] sm:$0xff]
        %v280 = vld [vmem:[%s266 + $0x38] sm:$0xff]
        %v281 = vld [vmem:[%s1] sm:$0xf]
        %v282 = vld [vmem:[%s2] sm:$0x1]
        %v284 = vlaneseq
        %v285 = vshrl.u32 %v284, 7
        %v286 = vsub.s32 0, %v285
        %v287 = vrot.slane %v282, %v286
        %vm289 = vcmask 31744
        %v291 = vsel %vm289, %v273, 0
        %v294 = vsel %vm289, %v274, 0
        %v297 = vsel %vm289, %v275, 0
        %v300 = vsel %vm289, %v276, 0
        %v303 = vsel %vm289, %v277, 0
        %v306 = vsel %vm289, %v278, 0
        %v309 = vsel %vm289, %v279, 0
        %v312 = vsel %vm289, %v280, 0
        %vm314 = vcmask 1043456
        %v316 = vsel %vm314, %v281, 0
        %318 = vmatprep.subr.mxu0 0.0
        %319 = vmatpush1.msra.mxu0 0.0
        %320 = vmatprep.subr.mxu0 0.0
        %321 = vmatpush1.msra.mxu0 0.0
        %322 = vmatprep.subr.mxu0 0.0
        %323 = vmatpush1.msra.mxu0 0.0
        %324 = vmatprep.subr.mxu0 0.0
        %325 = vmatpush1.msra.mxu0 0.0
        %326 = vmatprep.subr.mxu0 0.0
        %327 = vmatpush1.msra.mxu0 0.0
        %328 = vmatprep.subr.mxu0 0.0
        %329 = vmatpush1.msra.mxu0 0.0
        %330 = vmatprep.subr.mxu0 0.0
        %331 = vmatpush1.msra.mxu0 0.0
        %332 = vmatprep.subr.mxu0 0.0
        %333 = vmatpush1.msra.mxu0 0.0
        %334 = vmatprep.subr.mxu0 0.0
        %335 = vmatpush1.msra.mxu0 0.0
        %336 = vmatprep.subr.mxu0 0.0
        %337 = vmatpush1.msra.mxu0 0.0
        %338 = vmatprep.subr.mxu0 0.0
        %339 = vmatpush1.msra.mxu0 0.0
        %340 = vmatprep.subr.mxu0 0.0
        %341 = vmatpush1.msra.mxu0 0.0
        %342 = vmatprep.subr.mxu0 0.0
        %343 = vmatpush1.msra.mxu0 0.0
        %344 = vmatprep.subr.mxu0 0.0
        %345 = vmatpush1.msra.mxu0 0.0
        %346 = vmatprep.subr.mxu0 0.0
        %347 = vmatpush1.msra.mxu0 0.0
        %348 = vmatprep.subr.mxu0 0.0
        %349 = vmatpush1.msra.mxu0 %v316
        %350 = vmatprep.subr.mxu0 0.0
        %351 = vmatpush2.msra.mxu0 0.0
        %352 = vmatprep.subr.mxu0 0.0
        %353 = vmatpush2.msra.mxu0 0.0
        %354 = vmatprep.subr.mxu0 0.0
        %355 = vmatpush2.msra.mxu0 0.0
        %356 = vmatprep.subr.mxu0 0.0
        %357 = vmatpush2.msra.mxu0 0.0
        %358 = vmatprep.subr.mxu0 0.0
        %359 = vmatpush2.msra.mxu0 0.0
        %360 = vmatprep.subr.mxu0 0.0
        %361 = vmatpush2.msra.mxu0 0.0
        %362 = vmatprep.subr.mxu0 0.0
        %363 = vmatpush2.msra.mxu0 0.0
        %364 = vmatprep.subr.mxu0 0.0
        %365 = vmatpush2.msra.mxu0 0.0
        %366 = vmatprep.subr.mxu0 0.0
        %367 = vmatpush2.msra.mxu0 0.0
        %368 = vmatprep.subr.mxu0 0.0
        %369 = vmatpush2.msra.mxu0 0.0
        %370 = vmatprep.subr.mxu0 0.0
        %371 = vmatpush2.msra.mxu0 0.0
        %372 = vmatprep.subr.mxu0 0.0
        %373 = vmatpush2.msra.mxu0 0.0
        %374 = vmatprep.subr.mxu0 0.0
        %375 = vmatpush2.msra.mxu0 0.0
        %376 = vmatprep.subr.mxu0 0.0
        %377 = vmatpush2.msra.mxu0 0.0
        %378 = vmatprep.subr.mxu0 0.0
        %379 = vmatpush2.msra.mxu0 0.0
        %380 = vmatprep.subr.mxu0 0.0
        %381 = vmatpush2.msra.mxu0 0.0
        %382 = vmatprep.mubr.f32.mxu0 0.0
        %383 = vmatmul.mubr.f32.gmra.mxu0 %v291
        %v384 = vpop.f32.mrf.mxu0
        %v385 = vadd.f32 %v287, %v384
        %v386 = vpop.f32.mrf.mxu0
        %387 = vmatprep.mubr.f32.mxu0 0.0
        %388 = vmatmul.mubr.f32.gmra.mxu0 %v294
        %v389 = vpop.f32.mrf.mxu0
        %v390 = vadd.f32 %v287, %v389
        %v391 = vpop.f32.mrf.mxu0
        %392 = vmatprep.mubr.f32.mxu0 0.0
        %393 = vmatmul.mubr.f32.gmra.mxu0 %v297
        %v394 = vpop.f32.mrf.mxu0
        %v395 = vadd.f32 %v287, %v394
        %v396 = vpop.f32.mrf.mxu0
        %397 = vmatprep.mubr.f32.mxu0 0.0
        %398 = vmatmul.mubr.f32.gmra.mxu0 %v300
        %v399 = vpop.f32.mrf.mxu0
        %v400 = vadd.f32 %v287, %v399
        %v401 = vpop.f32.mrf.mxu0
        %402 = vmatprep.mubr.f32.mxu0 0.0
        %403 = vmatmul.mubr.f32.gmra.mxu0 %v303
        %v404 = vpop.f32.mrf.mxu0
        %v405 = vadd.f32 %v287, %v404
        %v406 = vpop.f32.mrf.mxu0
        %407 = vmatprep.mubr.f32.mxu0 0.0
        %408 = vmatmul.mubr.f32.gmra.mxu0 %v306
        %v409 = vpop.f32.mrf.mxu0
        %v410 = vadd.f32 %v287, %v409
        %v411 = vpop.f32.mrf.mxu0
        %412 = vmatprep.mubr.f32.mxu0 0.0
        %413 = vmatmul.mubr.f32.gmra.mxu0 %v309
        %v414 = vpop.f32.mrf.mxu0
        %v415 = vadd.f32 %v287, %v414
        %v416 = vpop.f32.mrf.mxu0
        %417 = vmatprep.mubr.f32.mxu0 0.0
        %418 = vmatmul.mubr.f32.gmra.mxu0 %v312
        %v419 = vpop.f32.mrf.mxu0
        %v420 = vadd.f32 %v287, %v419
        %v421 = vpop.f32.mrf.mxu0
        %422 = vdwg.mxu0
        %423 = vst [vmem:[#allocation3] sm:$0xff] %v385
        %424 = vst [vmem:[#allocation3 + $0x8] sm:$0xff] %v390
        %425 = vst [vmem:[#allocation3 + $0x10] sm:$0xff] %v395
        %426 = vst [vmem:[#allocation3 + $0x18] sm:$0xff] %v400
        %427 = vst [vmem:[#allocation3 + $0x20] sm:$0xff] %v405
        %428 = vst [vmem:[#allocation3 + $0x28] sm:$0xff] %v410
        %429 = vst [vmem:[#allocation3 + $0x30] sm:$0xff] %v415
        %430 = vst [vmem:[#allocation3 + $0x38] sm:$0xff] %v420
        %v431 = vld [vmem:[%s3] sm:$0xff]
        %v432 = vld [vmem:[%s3 + $0x8] sm:$0xff]
        %v433 = vld [vmem:[%s3 + $0x10] sm:$0xff]
        %v434 = vld [vmem:[%s3 + $0x18] sm:$0xff]
        %v435 = vld [vmem:[%s3 + $0x20] sm:$0xff]
        %v436 = vld [vmem:[%s3 + $0x28] sm:$0xff]
        %v437 = vld [vmem:[%s3 + $0x30] sm:$0xff]
        %v438 = vld [vmem:[%s3 + $0x38] sm:$0xff]
        %v439 = vld [vmem:[%s3 + $0x40] sm:$0xff]
        %v440 = vld [vmem:[%s3 + $0x48] sm:$0xff]
        %v441 = vld [vmem:[%s3 + $0x50] sm:$0xff]
        %v442 = vld [vmem:[%s3 + $0x58] sm:$0xff]
        %v443 = vld [vmem:[%s3 + $0x60] sm:$0xff]
        %v444 = vld [vmem:[%s3 + $0x68] sm:$0xff]
        %v445 = vld [vmem:[%s3 + $0x70] sm:$0xff]
        %v446 = vld [vmem:[%s3 + $0x78] sm:$0xff]
        %v447 = vld [vmem:[#allocation2] sm:$0xff]
        %v448 = vld [vmem:[#allocation3] sm:$0xff]
        %449 = vmatprep.subr.mxu0 0.0
        %450 = vmatpush1.msra.mxu0 %v446
        %451 = vmatprep.subr.mxu0 0.0
        %452 = vmatpush1.msra.mxu0 %v445
        %453 = vmatprep.subr.mxu0 0.0
        %454 = vmatpush1.msra.mxu0 %v444
        %455 = vmatprep.subr.mxu0 0.0
        %456 = vmatpush1.msra.mxu0 %v443
        %457 = vmatprep.subr.mxu0 0.0
        %458 = vmatpush1.msra.mxu0 %v442
        %459 = vmatprep.subr.mxu0 0.0
        %460 = vmatpush1.msra.mxu0 %v441
        %461 = vmatprep.subr.mxu0 0.0
        %462 = vmatpush1.msra.mxu0 %v440
        %463 = vmatprep.subr.mxu0 0.0
        %464 = vmatpush1.msra.mxu0 %v439
        %465 = vmatprep.subr.mxu0 0.0
        %466 = vmatpush1.msra.mxu0 %v438
        %467 = vmatprep.subr.mxu0 0.0
        %468 = vmatpush1.msra.mxu0 %v437
        %469 = vmatprep.subr.mxu0 0.0
        %470 = vmatpush1.msra.mxu0 %v436
        %471 = vmatprep.subr.mxu0 0.0
        %472 = vmatpush1.msra.mxu0 %v435
        %473 = vmatprep.subr.mxu0 0.0
        %474 = vmatpush1.msra.mxu0 %v434
        %475 = vmatprep.subr.mxu0 0.0
        %476 = vmatpush1.msra.mxu0 %v433
        %477 = vmatprep.subr.mxu0 0.0
        %478 = vmatpush1.msra.mxu0 %v432
        %479 = vmatprep.subr.mxu0 0.0
        %480 = vmatpush1.msra.mxu0 %v431
        %481 = vmatprep.subr.mxu0 0.0
        %482 = vmatpush2.msra.mxu0 0.0
        %483 = vmatprep.subr.mxu0 0.0
        %484 = vmatpush2.msra.mxu0 0.0
        %485 = vmatprep.subr.mxu0 0.0
        %486 = vmatpush2.msra.mxu0 0.0
        %487 = vmatprep.subr.mxu0 0.0
        %488 = vmatpush2.msra.mxu0 0.0
        %489 = vmatprep.subr.mxu0 0.0
        %490 = vmatpush2.msra.mxu0 0.0
        %491 = vmatprep.subr.mxu0 0.0
        %492 = vmatpush2.msra.mxu0 0.0
        %493 = vmatprep.subr.mxu0 0.0
        %494 = vmatpush2.msra.mxu0 0.0
        %495 = vmatprep.subr.mxu0 0.0
        %496 = vmatpush2.msra.mxu0 0.0
        %497 = vmatprep.subr.mxu0 0.0
        %498 = vmatpush2.msra.mxu0 0.0
        %499 = vmatprep.subr.mxu0 0.0
        %500 = vmatpush2.msra.mxu0 0.0
        %501 = vmatprep.subr.mxu0 0.0
        %502 = vmatpush2.msra.mxu0 0.0
        %503 = vmatprep.subr.mxu0 0.0
        %504 = vmatpush2.msra.mxu0 0.0
        %505 = vmatprep.subr.mxu0 0.0
        %506 = vmatpush2.msra.mxu0 0.0
        %507 = vmatprep.subr.mxu0 0.0
        %508 = vmatpush2.msra.mxu0 0.0
        %509 = vmatprep.subr.mxu0 0.0
        %510 = vmatpush2.msra.mxu0 0.0
        %511 = vmatprep.subr.mxu0 0.0
        %512 = vmatpush2.msra.mxu0 0.0
        %513 = vmatprep.mubr.f32.mxu0 0.0
        %514 = vmatmul.mubr.f32.gmra.mxu0 %v447
        %v515 = vpop.f32.mrf.mxu0
        %v516 = vadd.f32 %v448, %v515
        %v517 = vpop.f32.mrf.mxu0
        %518 = vdwg.mxu0
        %v519 = vtanh.pop %v516
        %v520 = vld [vmem:[#allocation3 + $0x8] sm:$0xff]
        %521 = vmatprep.subr.mxu0 0.0
        %522 = vmatpush1.msra.mxu0 %v446
        %523 = vmatprep.subr.mxu0 0.0
        %524 = vmatpush1.msra.mxu0 %v445
        %525 = vmatprep.subr.mxu0 0.0
        %526 = vmatpush1.msra.mxu0 %v444
        %527 = vmatprep.subr.mxu0 0.0
        %528 = vmatpush1.msra.mxu0 %v443
        %529 = vmatprep.subr.mxu0 0.0
        %530 = vmatpush1.msra.mxu0 %v442
        %531 = vmatprep.subr.mxu0 0.0
        %532 = vmatpush1.msra.mxu0 %v441
        %533 = vmatprep.subr.mxu0 0.0
        %534 = vmatpush1.msra.mxu0 %v440
        %535 = vmatprep.subr.mxu0 0.0
        %536 = vmatpush1.msra.mxu0 %v439
        %537 = vmatprep.subr.mxu0 0.0
        %538 = vmatpush1.msra.mxu0 %v438
        %539 = vmatprep.subr.mxu0 0.0
        %540 = vmatpush1.msra.mxu0 %v437
        %541 = vmatprep.subr.mxu0 0.0
        %542 = vmatpush1.msra.mxu0 %v436
        %543 = vmatprep.subr.mxu0 0.0
        %544 = vmatpush1.msra.mxu0 %v435
        %545 = vmatprep.subr.mxu0 0.0
        %546 = vmatpush1.msra.mxu0 %v434
        %547 = vmatprep.subr.mxu0 0.0
        %548 = vmatpush1.msra.mxu0 %v433
        %549 = vmatprep.subr.mxu0 0.0
        %550 = vmatpush1.msra.mxu0 %v432
        %551 = vmatprep.subr.mxu0 0.0
        %552 = vmatpush1.msra.mxu0 %v431
        %553 = vmatprep.subr.mxu0 0.0
        %554 = vmatpush2.msra.mxu0 0.0
        %555 = vmatprep.subr.mxu0 0.0
        %556 = vmatpush2.msra.mxu0 0.0
        %557 = vmatprep.subr.mxu0 0.0
        %558 = vmatpush2.msra.mxu0 0.0
        %559 = vmatprep.subr.mxu0 0.0
        %560 = vmatpush2.msra.mxu0 0.0
        %561 = vmatprep.subr.mxu0 0.0
        %562 = vmatpush2.msra.mxu0 0.0
        %563 = vmatprep.subr.mxu0 0.0
        %564 = vmatpush2.msra.mxu0 0.0
        %565 = vmatprep.subr.mxu0 0.0
        %566 = vmatpush2.msra.mxu0 0.0
        %567 = vmatprep.subr.mxu0 0.0
        %568 = vmatpush2.msra.mxu0 0.0
        %569 = vmatprep.subr.mxu0 0.0
        %570 = vmatpush2.msra.mxu0 0.0
        %571 = vmatprep.subr.mxu0 0.0
        %572 = vmatpush2.msra.mxu0 0.0
        %573 = vmatprep.subr.mxu0 0.0
        %574 = vmatpush2.msra.mxu0 0.0
        %575 = vmatprep.subr.mxu0 0.0
        %576 = vmatpush2.msra.mxu0 0.0
        %577 = vmatprep.subr.mxu0 0.0
        %578 = vmatpush2.msra.mxu0 0.0
        %579 = vmatprep.subr.mxu0 0.0
        %580 = vmatpush2.msra.mxu0 0.0
        %581 = vmatprep.subr.mxu0 0.0
        %582 = vmatpush2.msra.mxu0 0.0
        %583 = vmatprep.subr.mxu0 0.0
        %584 = vmatpush2.msra.mxu0 0.0
        %585 = vmatprep.mubr.f32.mxu0 0.0
        %586 = vmatmul.mubr.f32.gmra.mxu0 %v519
        %v587 = vpop.f32.mrf.mxu0
        %v588 = vadd.f32 %v520, %v587
        %v589 = vpop.f32.mrf.mxu0
        %590 = vdwg.mxu0
        %v591 = vtanh.pop %v588
        %v592 = vld [vmem:[#allocation3 + $0x10] sm:$0xff]
        %593 = vmatprep.subr.mxu0 0.0
        %594 = vmatpush1.msra.mxu0 %v446
        %595 = vmatprep.subr.mxu0 0.0
        %596 = vmatpush1.msra.mxu0 %v445
        %597 = vmatprep.subr.mxu0 0.0
        %598 = vmatpush1.msra.mxu0 %v444
        %599 = vmatprep.subr.mxu0 0.0
        %600 = vmatpush1.msra.mxu0 %v443
        %601 = vmatprep.subr.mxu0 0.0
        %602 = vmatpush1.msra.mxu0 %v442
        %603 = vmatprep.subr.mxu0 0.0
        %604 = vmatpush1.msra.mxu0 %v441
        %605 = vmatprep.subr.mxu0 0.0
        %606 = vmatpush1.msra.mxu0 %v440
        %607 = vmatprep.subr.mxu0 0.0
        %608 = vmatpush1.msra.mxu0 %v439
        %609 = vmatprep.subr.mxu0 0.0
        %610 = vmatpush1.msra.mxu0 %v438
        %611 = vmatprep.subr.mxu0 0.0
        %612 = vmatpush1.msra.mxu0 %v437
        %613 = vmatprep.subr.mxu0 0.0
        %614 = vmatpush1.msra.mxu0 %v436
        %615 = vmatprep.subr.mxu0 0.0
        %616 = vmatpush1.msra.mxu0 %v435
        %617 = vmatprep.subr.mxu0 0.0
        %618 = vmatpush1.msra.mxu0 %v434
        %619 = vmatprep.subr.mxu0 0.0
        %620 = vmatpush1.msra.mxu0 %v433
        %621 = vmatprep.subr.mxu0 0.0
        %622 = vmatpush1.msra.mxu0 %v432
        %623 = vmatprep.subr.mxu0 0.0
        %624 = vmatpush1.msra.mxu0 %v431
        %625 = vmatprep.subr.mxu0 0.0
        %626 = vmatpush2.msra.mxu0 0.0
        %627 = vmatprep.subr.mxu0 0.0
        %628 = vmatpush2.msra.mxu0 0.0
        %629 = vmatprep.subr.mxu0 0.0
        %630 = vmatpush2.msra.mxu0 0.0
        %631 = vmatprep.subr.mxu0 0.0
        %632 = vmatpush2.msra.mxu0 0.0
        %633 = vmatprep.subr.mxu0 0.0
        %634 = vmatpush2.msra.mxu0 0.0
        %635 = vmatprep.subr.mxu0 0.0
        %636 = vmatpush2.msra.mxu0 0.0
        %637 = vmatprep.subr.mxu0 0.0
        %638 = vmatpush2.msra.mxu0 0.0
        %639 = vmatprep.subr.mxu0 0.0
        %640 = vmatpush2.msra.mxu0 0.0
        %641 = vmatprep.subr.mxu0 0.0
        %642 = vmatpush2.msra.mxu0 0.0
        %643 = vmatprep.subr.mxu0 0.0
        %644 = vmatpush2.msra.mxu0 0.0
        %645 = vmatprep.subr.mxu0 0.0
        %646 = vmatpush2.msra.mxu0 0.0
        %647 = vmatprep.subr.mxu0 0.0
        %648 = vmatpush2.msra.mxu0 0.0
        %649 = vmatprep.subr.mxu0 0.0
        %650 = vmatpush2.msra.mxu0 0.0
        %651 = vmatprep.subr.mxu0 0.0
        %652 = vmatpush2.msra.mxu0 0.0
        %653 = vmatprep.subr.mxu0 0.0
        %654 = vmatpush2.msra.mxu0 0.0
        %655 = vmatprep.subr.mxu0 0.0
        %656 = vmatpush2.msra.mxu0 0.0
        %657 = vmatprep.mubr.f32.mxu0 0.0
        %658 = vmatmul.mubr.f32.gmra.mxu0 %v591
        %v659 = vpop.f32.mrf.mxu0
        %v660 = vadd.f32 %v592, %v659
        %v661 = vpop.f32.mrf.mxu0
        %662 = vdwg.mxu0
        %v663 = vtanh.pop %v660
        %v664 = vld [vmem:[#allocation3 + $0x18] sm:$0xff]
        %665 = vmatprep.subr.mxu0 0.0
        %666 = vmatpush1.msra.mxu0 %v446
        %667 = vmatprep.subr.mxu0 0.0
        %668 = vmatpush1.msra.mxu0 %v445
        %669 = vmatprep.subr.mxu0 0.0
        %670 = vmatpush1.msra.mxu0 %v444
        %671 = vmatprep.subr.mxu0 0.0
        %672 = vmatpush1.msra.mxu0 %v443
        %673 = vmatprep.subr.mxu0 0.0
        %674 = vmatpush1.msra.mxu0 %v442
        %675 = vmatprep.subr.mxu0 0.0
        %676 = vmatpush1.msra.mxu0 %v441
        %677 = vmatprep.subr.mxu0 0.0
        %678 = vmatpush1.msra.mxu0 %v440
        %679 = vmatprep.subr.mxu0 0.0
        %680 = vmatpush1.msra.mxu0 %v439
        %681 = vmatprep.subr.mxu0 0.0
        %682 = vmatpush1.msra.mxu0 %v438
        %683 = vmatprep.subr.mxu0 0.0
        %684 = vmatpush1.msra.mxu0 %v437
        %685 = vmatprep.subr.mxu0 0.0
        %686 = vmatpush1.msra.mxu0 %v436
        %687 = vmatprep.subr.mxu0 0.0
        %688 = vmatpush1.msra.mxu0 %v435
        %689 = vmatprep.subr.mxu0 0.0
        %690 = vmatpush1.msra.mxu0 %v434
        %691 = vmatprep.subr.mxu0 0.0
        %692 = vmatpush1.msra.mxu0 %v433
        %693 = vmatprep.subr.mxu0 0.0
        %694 = vmatpush1.msra.mxu0 %v432
        %695 = vmatprep.subr.mxu0 0.0
        %696 = vmatpush1.msra.mxu0 %v431
        %697 = vmatprep.subr.mxu0 0.0
        %698 = vmatpush2.msra.mxu0 0.0
        %699 = vmatprep.subr.mxu0 0.0
        %700 = vmatpush2.msra.mxu0 0.0
        %701 = vmatprep.subr.mxu0 0.0
        %702 = vmatpush2.msra.mxu0 0.0
        %703 = vmatprep.subr.mxu0 0.0
        %704 = vmatpush2.msra.mxu0 0.0
        %705 = vmatprep.subr.mxu0 0.0
        %706 = vmatpush2.msra.mxu0 0.0
        %707 = vmatprep.subr.mxu0 0.0
        %708 = vmatpush2.msra.mxu0 0.0
        %709 = vmatprep.subr.mxu0 0.0
        %710 = vmatpush2.msra.mxu0 0.0
        %711 = vmatprep.subr.mxu0 0.0
        %712 = vmatpush2.msra.mxu0 0.0
        %713 = vmatprep.subr.mxu0 0.0
        %714 = vmatpush2.msra.mxu0 0.0
        %715 = vmatprep.subr.mxu0 0.0
        %716 = vmatpush2.msra.mxu0 0.0
        %717 = vmatprep.subr.mxu0 0.0
        %718 = vmatpush2.msra.mxu0 0.0
        %719 = vmatprep.subr.mxu0 0.0
        %720 = vmatpush2.msra.mxu0 0.0
        %721 = vmatprep.subr.mxu0 0.0
        %722 = vmatpush2.msra.mxu0 0.0
        %723 = vmatprep.subr.mxu0 0.0
        %724 = vmatpush2.msra.mxu0 0.0
        %725 = vmatprep.subr.mxu0 0.0
        %726 = vmatpush2.msra.mxu0 0.0
        %727 = vmatprep.subr.mxu0 0.0
        %728 = vmatpush2.msra.mxu0 0.0
        %729 = vmatprep.mubr.f32.mxu0 0.0
        %730 = vmatmul.mubr.f32.gmra.mxu0 %v663
        %v731 = vpop.f32.mrf.mxu0
        %v732 = vadd.f32 %v664, %v731
        %v733 = vpop.f32.mrf.mxu0
        %734 = vdwg.mxu0
        %v735 = vtanh.pop %v732
        %v736 = vld [vmem:[#allocation3 + $0x20] sm:$0xff]
        %737 = vmatprep.subr.mxu0 0.0
        %738 = vmatpush1.msra.mxu0 %v446
        %739 = vmatprep.subr.mxu0 0.0
        %740 = vmatpush1.msra.mxu0 %v445
        %741 = vmatprep.subr.mxu0 0.0
        %742 = vmatpush1.msra.mxu0 %v444
        %743 = vmatprep.subr.mxu0 0.0
        %744 = vmatpush1.msra.mxu0 %v443
        %745 = vmatprep.subr.mxu0 0.0
        %746 = vmatpush1.msra.mxu0 %v442
        %747 = vmatprep.subr.mxu0 0.0
        %748 = vmatpush1.msra.mxu0 %v441
        %749 = vmatprep.subr.mxu0 0.0
        %750 = vmatpush1.msra.mxu0 %v440
        %751 = vmatprep.subr.mxu0 0.0
        %752 = vmatpush1.msra.mxu0 %v439
        %753 = vmatprep.subr.mxu0 0.0
        %754 = vmatpush1.msra.mxu0 %v438
        %755 = vmatprep.subr.mxu0 0.0
        %756 = vmatpush1.msra.mxu0 %v437
        %757 = vmatprep.subr.mxu0 0.0
        %758 = vmatpush1.msra.mxu0 %v436
        %759 = vmatprep.subr.mxu0 0.0
        %760 = vmatpush1.msra.mxu0 %v435
        %761 = vmatprep.subr.mxu0 0.0
        %762 = vmatpush1.msra.mxu0 %v434
        %763 = vmatprep.subr.mxu0 0.0
        %764 = vmatpush1.msra.mxu0 %v433
        %765 = vmatprep.subr.mxu0 0.0
        %766 = vmatpush1.msra.mxu0 %v432
        %767 = vmatprep.subr.mxu0 0.0
        %768 = vmatpush1.msra.mxu0 %v431
        %769 = vmatprep.subr.mxu0 0.0
        %770 = vmatpush2.msra.mxu0 0.0
        %771 = vmatprep.subr.mxu0 0.0
        %772 = vmatpush2.msra.mxu0 0.0
        %773 = vmatprep.subr.mxu0 0.0
        %774 = vmatpush2.msra.mxu0 0.0
        %775 = vmatprep.subr.mxu0 0.0
        %776 = vmatpush2.msra.mxu0 0.0
        %777 = vmatprep.subr.mxu0 0.0
        %778 = vmatpush2.msra.mxu0 0.0
        %779 = vmatprep.subr.mxu0 0.0
        %780 = vmatpush2.msra.mxu0 0.0
        %781 = vmatprep.subr.mxu0 0.0
        %782 = vmatpush2.msra.mxu0 0.0
        %783 = vmatprep.subr.mxu0 0.0
        %784 = vmatpush2.msra.mxu0 0.0
        %785 = vmatprep.subr.mxu0 0.0
        %786 = vmatpush2.msra.mxu0 0.0
        %787 = vmatprep.subr.mxu0 0.0
        %788 = vmatpush2.msra.mxu0 0.0
        %789 = vmatprep.subr.mxu0 0.0
        %790 = vmatpush2.msra.mxu0 0.0
        %791 = vmatprep.subr.mxu0 0.0
        %792 = vmatpush2.msra.mxu0 0.0
        %793 = vmatprep.subr.mxu0 0.0
        %794 = vmatpush2.msra.mxu0 0.0
        %795 = vmatprep.subr.mxu0 0.0
        %796 = vmatpush2.msra.mxu0 0.0
        %797 = vmatprep.subr.mxu0 0.0
        %798 = vmatpush2.msra.mxu0 0.0
        %799 = vmatprep.subr.mxu0 0.0
        %800 = vmatpush2.msra.mxu0 0.0
        %801 = vmatprep.mubr.f32.mxu0 0.0
        %802 = vmatmul.mubr.f32.gmra.mxu0 %v735
        %v803 = vpop.f32.mrf.mxu0
        %v804 = vadd.f32 %v736, %v803
        %v805 = vpop.f32.mrf.mxu0
        %806 = vdwg.mxu0
        %v807 = vtanh.pop %v804
        %v808 = vld [vmem:[#allocation3 + $0x28] sm:$0xff]
        %809 = vmatprep.subr.mxu0 0.0
        %810 = vmatpush1.msra.mxu0 %v446
        %811 = vmatprep.subr.mxu0 0.0
        %812 = vmatpush1.msra.mxu0 %v445
        %813 = vmatprep.subr.mxu0 0.0
        %814 = vmatpush1.msra.mxu0 %v444
        %815 = vmatprep.subr.mxu0 0.0
        %816 = vmatpush1.msra.mxu0 %v443
        %817 = vmatprep.subr.mxu0 0.0
        %818 = vmatpush1.msra.mxu0 %v442
        %819 = vmatprep.subr.mxu0 0.0
        %820 = vmatpush1.msra.mxu0 %v441
        %821 = vmatprep.subr.mxu0 0.0
        %822 = vmatpush1.msra.mxu0 %v440
        %823 = vmatprep.subr.mxu0 0.0
        %824 = vmatpush1.msra.mxu0 %v439
        %825 = vmatprep.subr.mxu0 0.0
        %826 = vmatpush1.msra.mxu0 %v438
        %827 = vmatprep.subr.mxu0 0.0
        %828 = vmatpush1.msra.mxu0 %v437
        %829 = vmatprep.subr.mxu0 0.0
        %830 = vmatpush1.msra.mxu0 %v436
        %831 = vmatprep.subr.mxu0 0.0
        %832 = vmatpush1.msra.mxu0 %v435
        %833 = vmatprep.subr.mxu0 0.0
        %834 = vmatpush1.msra.mxu0 %v434
        %835 = vmatprep.subr.mxu0 0.0
        %836 = vmatpush1.msra.mxu0 %v433
        %837 = vmatprep.subr.mxu0 0.0
        %838 = vmatpush1.msra.mxu0 %v432
        %839 = vmatprep.subr.mxu0 0.0
        %840 = vmatpush1.msra.mxu0 %v431
        %841 = vmatprep.subr.mxu0 0.0
        %842 = vmatpush2.msra.mxu0 0.0
        %843 = vmatprep.subr.mxu0 0.0
        %844 = vmatpush2.msra.mxu0 0.0
        %845 = vmatprep.subr.mxu0 0.0
        %846 = vmatpush2.msra.mxu0 0.0
        %847 = vmatprep.subr.mxu0 0.0
        %848 = vmatpush2.msra.mxu0 0.0
        %849 = vmatprep.subr.mxu0 0.0
        %850 = vmatpush2.msra.mxu0 0.0
        %851 = vmatprep.subr.mxu0 0.0
        %852 = vmatpush2.msra.mxu0 0.0
        %853 = vmatprep.subr.mxu0 0.0
        %854 = vmatpush2.msra.mxu0 0.0
        %855 = vmatprep.subr.mxu0 0.0
        %856 = vmatpush2.msra.mxu0 0.0
        %857 = vmatprep.subr.mxu0 0.0
        %858 = vmatpush2.msra.mxu0 0.0
        %859 = vmatprep.subr.mxu0 0.0
        %860 = vmatpush2.msra.mxu0 0.0
        %861 = vmatprep.subr.mxu0 0.0
        %862 = vmatpush2.msra.mxu0 0.0
        %863 = vmatprep.subr.mxu0 0.0
        %864 = vmatpush2.msra.mxu0 0.0
        %865 = vmatprep.subr.mxu0 0.0
        %866 = vmatpush2.msra.mxu0 0.0
        %867 = vmatprep.subr.mxu0 0.0
        %868 = vmatpush2.msra.mxu0 0.0
        %869 = vmatprep.subr.mxu0 0.0
        %870 = vmatpush2.msra.mxu0 0.0
        %871 = vmatprep.subr.mxu0 0.0
        %872 = vmatpush2.msra.mxu0 0.0
        %873 = vmatprep.mubr.f32.mxu0 0.0
        %874 = vmatmul.mubr.f32.gmra.mxu0 %v807
        %v875 = vpop.f32.mrf.mxu0
        %v876 = vadd.f32 %v808, %v875
        %v877 = vpop.f32.mrf.mxu0
        %878 = vdwg.mxu0
        %v879 = vtanh.pop %v876
        %v880 = vld [vmem:[#allocation3 + $0x30] sm:$0xff]
        %881 = vmatprep.subr.mxu0 0.0
        %882 = vmatpush1.msra.mxu0 %v446
        %883 = vmatprep.subr.mxu0 0.0
        %884 = vmatpush1.msra.mxu0 %v445
        %885 = vmatprep.subr.mxu0 0.0
        %886 = vmatpush1.msra.mxu0 %v444
        %887 = vmatprep.subr.mxu0 0.0
        %888 = vmatpush1.msra.mxu0 %v443
        %889 = vmatprep.subr.mxu0 0.0
        %890 = vmatpush1.msra.mxu0 %v442
        %891 = vmatprep.subr.mxu0 0.0
        %892 = vmatpush1.msra.mxu0 %v441
        %893 = vmatprep.subr.mxu0 0.0
        %894 = vmatpush1.msra.mxu0 %v440
        %895 = vmatprep.subr.mxu0 0.0
        %896 = vmatpush1.msra.mxu0 %v439
        %897 = vmatprep.subr.mxu0 0.0
        %898 = vmatpush1.msra.mxu0 %v438
        %899 = vmatprep.subr.mxu0 0.0
        %900 = vmatpush1.msra.mxu0 %v437
        %901 = vmatprep.subr.mxu0 0.0
        %902 = vmatpush1.msra.mxu0 %v436
        %903 = vmatprep.subr.mxu0 0.0
        %904 = vmatpush1.msra.mxu0 %v435
        %905 = vmatprep.subr.mxu0 0.0
        %906 = vmatpush1.msra.mxu0 %v434
        %907 = vmatprep.subr.mxu0 0.0
        %908 = vmatpush1.msra.mxu0 %v433
        %909 = vmatprep.subr.mxu0 0.0
        %910 = vmatpush1.msra.mxu0 %v432
        %911 = vmatprep.subr.mxu0 0.0
        %912 = vmatpush1.msra.mxu0 %v431
        %913 = vmatprep.subr.mxu0 0.0
        %914 = vmatpush2.msra.mxu0 0.0
        %915 = vmatprep.subr.mxu0 0.0
        %916 = vmatpush2.msra.mxu0 0.0
        %917 = vmatprep.subr.mxu0 0.0
        %918 = vmatpush2.msra.mxu0 0.0
        %919 = vmatprep.subr.mxu0 0.0
        %920 = vmatpush2.msra.mxu0 0.0
        %921 = vmatprep.subr.mxu0 0.0
        %922 = vmatpush2.msra.mxu0 0.0
        %923 = vmatprep.subr.mxu0 0.0
        %924 = vmatpush2.msra.mxu0 0.0
        %925 = vmatprep.subr.mxu0 0.0
        %926 = vmatpush2.msra.mxu0 0.0
        %927 = vmatprep.subr.mxu0 0.0
        %928 = vmatpush2.msra.mxu0 0.0
        %929 = vmatprep.subr.mxu0 0.0
        %930 = vmatpush2.msra.mxu0 0.0
        %931 = vmatprep.subr.mxu0 0.0
        %932 = vmatpush2.msra.mxu0 0.0
        %933 = vmatprep.subr.mxu0 0.0
        %934 = vmatpush2.msra.mxu0 0.0
        %935 = vmatprep.subr.mxu0 0.0
        %936 = vmatpush2.msra.mxu0 0.0
        %937 = vmatprep.subr.mxu0 0.0
        %938 = vmatpush2.msra.mxu0 0.0
        %939 = vmatprep.subr.mxu0 0.0
        %940 = vmatpush2.msra.mxu0 0.0
        %941 = vmatprep.subr.mxu0 0.0
        %942 = vmatpush2.msra.mxu0 0.0
        %943 = vmatprep.subr.mxu0 0.0
        %944 = vmatpush2.msra.mxu0 0.0
        %945 = vmatprep.mubr.f32.mxu0 0.0
        %946 = vmatmul.mubr.f32.gmra.mxu0 %v879
        %v947 = vpop.f32.mrf.mxu0
        %v948 = vadd.f32 %v880, %v947
        %v949 = vpop.f32.mrf.mxu0
        %950 = vdwg.mxu0
        %v951 = vtanh.pop %v948
        %v952 = vld [vmem:[#allocation3 + $0x38] sm:$0xff]
        %953 = vmatprep.subr.mxu0 0.0
        %954 = vmatpush1.msra.mxu0 %v446
        %955 = vmatprep.subr.mxu0 0.0
        %956 = vmatpush1.msra.mxu0 %v445
        %957 = vmatprep.subr.mxu0 0.0
        %958 = vmatpush1.msra.mxu0 %v444
        %959 = vmatprep.subr.mxu0 0.0
        %960 = vmatpush1.msra.mxu0 %v443
        %961 = vmatprep.subr.mxu0 0.0
        %962 = vmatpush1.msra.mxu0 %v442
        %963 = vmatprep.subr.mxu0 0.0
        %964 = vmatpush1.msra.mxu0 %v441
        %965 = vmatprep.subr.mxu0 0.0
        %966 = vmatpush1.msra.mxu0 %v440
        %967 = vmatprep.subr.mxu0 0.0
        %968 = vmatpush1.msra.mxu0 %v439
        %969 = vmatprep.subr.mxu0 0.0
        %970 = vmatpush1.msra.mxu0 %v438
        %971 = vmatprep.subr.mxu0 0.0
        %972 = vmatpush1.msra.mxu0 %v437
        %973 = vmatprep.subr.mxu0 0.0
        %974 = vmatpush1.msra.mxu0 %v436
        %975 = vmatprep.subr.mxu0 0.0
        %976 = vmatpush1.msra.mxu0 %v435
        %977 = vmatprep.subr.mxu0 0.0
        %978 = vmatpush1.msra.mxu0 %v434
        %979 = vmatprep.subr.mxu0 0.0
        %980 = vmatpush1.msra.mxu0 %v433
        %981 = vmatprep.subr.mxu0 0.0
        %982 = vmatpush1.msra.mxu0 %v432
        %983 = vmatprep.subr.mxu0 0.0
        %984 = vmatpush1.msra.mxu0 %v431
        %985 = vmatprep.subr.mxu0 0.0
        %986 = vmatpush2.msra.mxu0 0.0
        %987 = vmatprep.subr.mxu0 0.0
        %988 = vmatpush2.msra.mxu0 0.0
        %989 = vmatprep.subr.mxu0 0.0
        %990 = vmatpush2.msra.mxu0 0.0
        %991 = vmatprep.subr.mxu0 0.0
        %992 = vmatpush2.msra.mxu0 0.0
        %993 = vmatprep.subr.mxu0 0.0
        %994 = vmatpush2.msra.mxu0 0.0
        %995 = vmatprep.subr.mxu0 0.0
        %996 = vmatpush2.msra.mxu0 0.0
        %997 = vmatprep.subr.mxu0 0.0
        %998 = vmatpush2.msra.mxu0 0.0
        %999 = vmatprep.subr.mxu0 0.0
        %1000 = vmatpush2.msra.mxu0 0.0
        %1001 = vmatprep.subr.mxu0 0.0
        %1002 = vmatpush2.msra.mxu0 0.0
        %1003 = vmatprep.subr.mxu0 0.0
        %1004 = vmatpush2.msra.mxu0 0.0
        %1005 = vmatprep.subr.mxu0 0.0
        %1006 = vmatpush2.msra.mxu0 0.0
        %1007 = vmatprep.subr.mxu0 0.0
        %1008 = vmatpush2.msra.mxu0 0.0
        %1009 = vmatprep.subr.mxu0 0.0
        %1010 = vmatpush2.msra.mxu0 0.0
        %1011 = vmatprep.subr.mxu0 0.0
        %1012 = vmatpush2.msra.mxu0 0.0
        %1013 = vmatprep.subr.mxu0 0.0
        %1014 = vmatpush2.msra.mxu0 0.0
        %1015 = vmatprep.subr.mxu0 0.0
        %1016 = vmatpush2.msra.mxu0 0.0
        %1017 = vmatprep.mubr.f32.mxu0 0.0
        %1018 = vmatmul.mubr.f32.gmra.mxu0 %v951
        %v1019 = vpop.f32.mrf.mxu0
        %v1020 = vadd.f32 %v952, %v1019
        %v1021 = vpop.f32.mrf.mxu0
        %1022 = vdwg.mxu0
        %v1023 = vtanh.pop %v1020
        %1024 = vst [vmem:[#allocation2] sm:$0xff] %v1023
        %p1025 = scmp.eq.s32.totalorder %s23, 1
        // Predicated region
        $region49: #{tpu_custom_call.1} parent=43 // pred_check
          %p1026 = pneg %p1025
        $region50: #{tpu_custom_call.1} parent=43 // pred_check_branch
          %1028 = sbr.rel (%p1026) target = $region52
        $region51: #{tpu_custom_call.1} parent=43 // pred_region
          %v1029 = vld [vmem:[%s4] sm:$0xff]
          %v1030 = vld [vmem:[%s4 + $0x8] sm:$0xff]
          %v1031 = vld [vmem:[%s4 + $0x10] sm:$0xff]
          %v1032 = vld [vmem:[%s4 + $0x18] sm:$0xff]
          %v1033 = vld [vmem:[%s4 + $0x20] sm:$0xff]
          %v1034 = vld [vmem:[%s4 + $0x28] sm:$0xff]
          %v1035 = vld [vmem:[%s4 + $0x30] sm:$0xff]
          %v1036 = vld [vmem:[%s4 + $0x38] sm:$0xff]
          %v1037 = vld [vmem:[%s4 + $0x40] sm:$0xff]
          %v1038 = vld [vmem:[%s4 + $0x48] sm:$0xff]
          %v1039 = vld [vmem:[%s4 + $0x50] sm:$0xff]
          %v1040 = vld [vmem:[%s4 + $0x58] sm:$0xff]
          %v1041 = vld [vmem:[%s4 + $0x60] sm:$0xff]
          %v1042 = vld [vmem:[%s4 + $0x68] sm:$0xff]
          %v1043 = vld [vmem:[%s4 + $0x70] sm:$0xff]
          %v1044 = vld [vmem:[%s4 + $0x78] sm:$0xff]
          %v1045 = vld [vmem:[%s5] sm:$0x1]
          %v1047 = vlaneseq
          %v1048 = vshrl.u32 %v1047, 7
          %v1049 = vsub.s32 0, %v1048
          %v1050 = vrot.slane %v1045, %v1049
          %1052 = vmatprep.subr.mxu0 0.0
          %1053 = vmatpush1.msra.mxu0 %v1044
          %1054 = vmatprep.subr.mxu0 0.0
          %1055 = vmatpush1.msra.mxu0 %v1043
          %1056 = vmatprep.subr.mxu0 0.0
          %1057 = vmatpush1.msra.mxu0 %v1042
          %1058 = vmatprep.subr.mxu0 0.0
          %1059 = vmatpush1.msra.mxu0 %v1041
          %1060 = vmatprep.subr.mxu0 0.0
          %1061 = vmatpush1.msra.mxu0 %v1040
          %1062 = vmatprep.subr.mxu0 0.0
          %1063 = vmatpush1.msra.mxu0 %v1039
          %1064 = vmatprep.subr.mxu0 0.0
          %1065 = vmatpush1.msra.mxu0 %v1038
          %1066 = vmatprep.subr.mxu0 0.0
          %1067 = vmatpush1.msra.mxu0 %v1037
          %1068 = vmatprep.subr.mxu0 0.0
          %1069 = vmatpush1.msra.mxu0 %v1036
          %1070 = vmatprep.subr.mxu0 0.0
          %1071 = vmatpush1.msra.mxu0 %v1035
          %1072 = vmatprep.subr.mxu0 0.0
          %1073 = vmatpush1.msra.mxu0 %v1034
          %1074 = vmatprep.subr.mxu0 0.0
          %1075 = vmatpush1.msra.mxu0 %v1033
          %1076 = vmatprep.subr.mxu0 0.0
          %1077 = vmatpush1.msra.mxu0 %v1032
          %1078 = vmatprep.subr.mxu0 0.0
          %1079 = vmatpush1.msra.mxu0 %v1031
          %1080 = vmatprep.subr.mxu0 0.0
          %1081 = vmatpush1.msra.mxu0 %v1030
          %1082 = vmatprep.subr.mxu0 0.0
          %1083 = vmatpush1.msra.mxu0 %v1029
          %1084 = vmatprep.subr.mxu0 0.0
          %1085 = vmatpush2.msra.mxu0 0.0
          %1086 = vmatprep.subr.mxu0 0.0
          %1087 = vmatpush2.msra.mxu0 0.0
          %1088 = vmatprep.subr.mxu0 0.0
          %1089 = vmatpush2.msra.mxu0 0.0
          %1090 = vmatprep.subr.mxu0 0.0
          %1091 = vmatpush2.msra.mxu0 0.0
          %1092 = vmatprep.subr.mxu0 0.0
          %1093 = vmatpush2.msra.mxu0 0.0
          %1094 = vmatprep.subr.mxu0 0.0
          %1095 = vmatpush2.msra.mxu0 0.0
          %1096 = vmatprep.subr.mxu0 0.0
          %1097 = vmatpush2.msra.mxu0 0.0
          %1098 = vmatprep.subr.mxu0 0.0
          %1099 = vmatpush2.msra.mxu0 0.0
          %1100 = vmatprep.subr.mxu0 0.0
          %1101 = vmatpush2.msra.mxu0 0.0
          %1102 = vmatprep.subr.mxu0 0.0
          %1103 = vmatpush2.msra.mxu0 0.0
          %1104 = vmatprep.subr.mxu0 0.0
          %1105 = vmatpush2.msra.mxu0 0.0
          %1106 = vmatprep.subr.mxu0 0.0
          %1107 = vmatpush2.msra.mxu0 0.0
          %1108 = vmatprep.subr.mxu0 0.0
          %1109 = vmatpush2.msra.mxu0 0.0
          %1110 = vmatprep.subr.mxu0 0.0
          %1111 = vmatpush2.msra.mxu0 0.0
          %1112 = vmatprep.subr.mxu0 0.0
          %1113 = vmatpush2.msra.mxu0 0.0
          %1114 = vmatprep.subr.mxu0 0.0
          %1115 = vmatpush2.msra.mxu0 0.0
          %1116 = vmatprep.mubr.f32.mxu0 0.0
          %1117 = vmatmul.mubr.f32.gmra.mxu0 %v1023
          %v1118 = vpop.f32.mrf.mxu0
          %v1119 = vadd.f32 %v1050, %v1118
          %v1120 = vpop.f32.mrf.mxu0
          %1121 = vdwg.mxu0
          %vm1122 = vcmask 64512
          %1123 = vst.msk [vmem:[#allocation4] sm:$0xff] %vm1122, %v1119
        $region52: #{tpu_custom_call.1} parent=43 // pred_fallthru
          _
        // Predicated region
        $region53: #{tpu_custom_call.1} parent=43 // pred_check
          %p1124 = pneg %p181
        $region54: #{tpu_custom_call.1} parent=43 // pred_check_branch
          %1126 = sbr.rel (%p1124) target = $region56
        $region55: #{tpu_custom_call.1} parent=43 // pred_region
          %s1128 = ssub.s32 128, 128
          %1129 = vsyncadd [#allocation5], %s1128
          %s1130 = smul.addr %s22, 128
          %s1131 = scalar_lea.hbm %s6, %s1130
          %s1133 = sshll.u32 [#allocation4], 4
          %s1134 = int_to_ptr.vmem [resolvable:$true] %s1133
          %1136 = dma.vmem_to_hbm [thread:$0]  %s1134, 128, %s1131, [#allocation5]
        $region56: #{tpu_custom_call.1} parent=43 // pred_fallthru
          _
        // Predicated region
        $region57: #{tpu_custom_call.1} parent=43 // pred_check
          %p1137 = pneg %p181
        $region58: #{tpu_custom_call.1} parent=43 // pred_check_branch
          %1139 = sbr.rel (%p1137) target = $region60
        $region59: #{tpu_custom_call.1} parent=43 // pred_region
          %1140 = dma.done [#allocation5], 128
        $region60: #{tpu_custom_call.1} parent=43 // pred_fallthru
          _
      $region44: #{tpu_custom_call.1} parent=5 // pred_fallthru
        _
      %p1141 = scmp.le.s32.totalorder 2, %s13
      // Predicated region
      $region61: #{tpu_custom_call.1} parent=5 // pred_check
        %p1142 = pneg %p1141
      $region62: #{tpu_custom_call.1} parent=5 // pred_check_branch
        %1144 = sbr.rel (%p1142) target = $region64
      $region63: #{tpu_custom_call.1} parent=5 // pred_region
        %s1145 = ssub.s32 %s13, 2
      $region64: #{tpu_custom_call.1} parent=5 // pred_fallthru
        _
    $region6: #{tpu_custom_call.1} parent=1 // loop_footer
      %s17 = sadd.s32 1, %s13
    $region7: #{tpu_custom_call.1} parent=1 // loop_footer_branch
      %12 = sbr.rel target = $region3
    $region8: #{tpu_custom_call.1} parent=1 // loop_exit
      _
    %1146 = vsyncpa [#allocation5], 1
    %s1147 = scalar_lea.sflag [#allocation5], 1
    %1148 = vsyncpa %s1147, 1

// kernel: tpu_custom_call.1
$region0: #{tpu_custom_call.1}
  #allocation0 [shape = 'u32[]', space=smem, size = 0x4, offset = 0x4, fixed_abs, tag = 'smem constant byte address 0x4 - core index']
  #allocation1 [shape = 'u32[144,128]{1,0:T(1,128)}', space=vmem, size = 0x12000, scoped, tag = 'internal scratch']
  #allocation2 [shape = 'f32[8,128]{1,0:T(8,128)}', space=vmem, size = 0x1000, scoped, tag = 'scratch operand']
  #allocation3 [shape = 'f32[64,128]{1,0:T(8,128)}', space=vmem, size = 0x8000, scoped, tag = 'scratch operand']
  %s0 = inlined_call_operand.vmem [shape: f32[16,8,4], index: 0, kind: input, shape index: {}]
  %s1 = inlined_call_operand.vmem [shape: f32[4,128], index: 1, kind: input, shape index: {}]
  %s2 = inlined_call_operand.vmem [shape: f32[1,128], index: 2, kind: input, shape index: {}]
  %s3 = inlined_call_operand.vmem [shape: f32[128,128], index: 3, kind: input, shape index: {}]
  %s4 = inlined_call_operand.vmem [shape: f32[128,8], index: 4, kind: input, shape index: {}]
  %s5 = inlined_call_operand.vmem [shape: f32[1,8], index: 5, kind: input, shape index: {}]
  %s6 = inlined_call_operand.hbm [shape: f32[8,8], index: 6, kind: output, shape index: {}]
  %s7 = sld [smem:[#allocation0]]
  $region65: #{tpu_custom_call.1} parent=0
    _
  %s9 = ssub.s32 1, %s7
  %s10 = scalar_select 0, %s9, %s7
  $region1: #{tpu_custom_call.1} parent=0
    #allocation4 [shape = 'u8[4096]{0}', space=vmem, size = 0x1000, scoped, tag = 'output window, operand 0, single buffered']
    #allocation5 [shape = 's32[2]{0}', space=sflag, size = 0x8, scoped, tag = 'scoped memory for tpu_custom_call.1']
    %11 = vsyncpa [#allocation5], 0
    loop: start=0, step=1, limit=4
    $region2: #{tpu_custom_call.1} parent=1 // loop_pre_header
      _
    $region3: #{tpu_custom_call.1} parent=1 // loop_header
      %s13 = sphi 0, %s17
      %p14 = scmp.ge.s32.totalorder %s13, 4
      %s20 = sphi 0, %s32
      %s21 = sphi 0, %s28
      %s22 = sphi 0, %s20
      %s23 = sphi 0, %s21
      %s24 = sphi 0, %s22
      %s25 = sphi 0, %s23
      %s37 = sphi 0, %s39
      %s40 = sphi 0, %s37
      %s41 = sphi 0, %s40
      %s57 = sphi 0, %s41
      %s61 = sphi 0, %s61
      %s63 = sphi 0, %s61
      %s64 = sphi 0, %s63
      %s78 = sphi 0, %s64
      %s82 = sphi 0, %s82
      %s84 = sphi 0, %s82
      %s85 = sphi 0, %s84
      %s99 = sphi 0, %s85
      %s103 = sphi 0, %s103
      %s105 = sphi 0, %s103
      %s106 = sphi 0, %s105
      %s120 = sphi 0, %s106
      %s124 = sphi 0, %s124
      %s126 = sphi 0, %s124
      %s127 = sphi 0, %s126
      %s141 = sphi 0, %s127
      %s145 = sphi 0, %s145
      %s147 = sphi 0, %s145
      %s148 = sphi 0, %s147
      %s162 = sphi 0, %s148
      %s168 = sphi 0, %s170
      %s171 = sphi 0, %s168
      %s172 = sphi 0, %s171
      %s188 = sphi 0, %s172
    $region4: #{tpu_custom_call.1} parent=1 // loop_header_branch
      %16 = sbr.rel (%p14) target = $region8
    $region5: #{tpu_custom_call.1} parent=1 // loop_body
      %s18 = ssub.s32 %s13, 1
      %s19 = ssub.s32 %s13, 2
      %s26 = sadd.s32 1, %s21
      %p27 = scmp.ge.s32.totalorder %s26, 2
      %s28 = scalar_select %p27, 0, %s26
      %s29 = sadd.s32 1, %s20
      %s30 = scalar_select %p27, %s29, %s20
      %p31 = scmp.ge.s32.totalorder %s30, 1
      %s32 = scalar_select %p31, 0, %s30
      %s33 = ssub.s32 %s21, %s28
      %s34 = ssub.s32 %s20, %s32
      %s35 = sor.u32 %s33, %s34
      %p36 = scmp.eq.s32.totalorder %s35, 0
      %s38 = sadd.s32 %s37, 1
      %s39 = scalar_select %p36, %s37, %s38
      %p42 = pneg %p36
      %p43 = scmp.eq.s32.totalorder %s13, 1
      %p44 = por %p42, %p43
      %p45 = scmp.ne.s32.totalorder %s37, %s40
      %p46 = scmp.eq.s32.totalorder %s13, 0
      %p47 = por %p45, %p46
      %p48 = scmp.ne.s32.totalorder %s37, %s40
      %p49 = scmp.eq.s32.totalorder %s18, 1
      %p50 = por %p48, %p49
      %p51 = scmp.ne.s32.totalorder %s40, %s41
      %p52 = scmp.eq.s32.totalorder %s18, 0
      %p53 = por %p51, %p52
      %p54 = scmp.ne.s32.totalorder %s40, %s41
      %p55 = scmp.eq.s32.totalorder %s19, 1
      %p56 = por %p54, %p55
      %p58 = scmp.ne.s32.totalorder %s41, %s57
      %p59 = scmp.eq.s32.totalorder %s19, 0
      %p60 = por %p58, %p59
      %s62 = sadd.s32 %s61, 1
      %p65 = scmp.eq.s32.totalorder %s13, 1
      %p66 = scmp.ne.s32.totalorder %s61, %s63
      %p67 = scmp.eq.s32.totalorder %s13, 0
      %p68 = por %p66, %p67
      %p69 = scmp.ne.s32.totalorder %s61, %s63
      %p70 = scmp.eq.s32.totalorder %s18, 1
      %p71 = por %p69, %p70
      %p72 = scmp.ne.s32.totalorder %s63, %s64
      %p73 = scmp.eq.s32.totalorder %s18, 0
      %p74 = por %p72, %p73
      %p75 = scmp.ne.s32.totalorder %s63, %s64
      %p76 = scmp.eq.s32.totalorder %s19, 1
      %p77 = por %p75, %p76
      %p79 = scmp.ne.s32.totalorder %s64, %s78
      %p80 = scmp.eq.s32.totalorder %s19, 0
      %p81 = por %p79, %p80
      %s83 = sadd.s32 %s82, 1
      %p86 = scmp.eq.s32.totalorder %s13, 1
      %p87 = scmp.ne.s32.totalorder %s82, %s84
      %p88 = scmp.eq.s32.totalorder %s13, 0
      %p89 = por %p87, %p88
      %p90 = scmp.ne.s32.totalorder %s82, %s84
      %p91 = scmp.eq.s32.totalorder %s18, 1
      %p92 = por %p90, %p91
      %p93 = scmp.ne.s32.totalorder %s84, %s85
      %p94 = scmp.eq.s32.totalorder %s18, 0
      %p95 = por %p93, %p94
      %p96 = scmp.ne.s32.totalorder %s84, %s85
      %p97 = scmp.eq.s32.totalorder %s19, 1
      %p98 = por %p96, %p97
      %p100 = scmp.ne.s32.totalorder %s85, %s99
      %p101 = scmp.eq.s32.totalorder %s19, 0
      %p102 = por %p100, %p101
      %s104 = sadd.s32 %s103, 1
      %p107 = scmp.eq.s32.totalorder %s13, 1
      %p108 = scmp.ne.s32.totalorder %s103, %s105
      %p109 = scmp.eq.s32.totalorder %s13, 0
      %p110 = por %p108, %p109
      %p111 = scmp.ne.s32.totalorder %s103, %s105
      %p112 = scmp.eq.s32.totalorder %s18, 1
      %p113 = por %p111, %p112
      %p114 = scmp.ne.s32.totalorder %s105, %s106
      %p115 = scmp.eq.s32.totalorder %s18, 0
      %p116 = por %p114, %p115
      %p117 = scmp.ne.s32.totalorder %s105, %s106
      %p118 = scmp.eq.s32.totalorder %s19, 1
      %p119 = por %p117, %p118
      %p121 = scmp.ne.s32.totalorder %s106, %s120
      %p122 = scmp.eq.s32.totalorder %s19, 0
      %p123 = por %p121, %p122
      %s125 = sadd.s32 %s124, 1
      %p128 = scmp.eq.s32.totalorder %s13, 1
      %p129 = scmp.ne.s32.totalorder %s124, %s126
      %p130 = scmp.eq.s32.totalorder %s13, 0
      %p131 = por %p129, %p130
      %p132 = scmp.ne.s32.totalorder %s124, %s126
      %p133 = scmp.eq.s32.totalorder %s18, 1
      %p134 = por %p132, %p133
      %p135 = scmp.ne.s32.totalorder %s126, %s127
      %p136 = scmp.eq.s32.totalorder %s18, 0
      %p137 = por %p135, %p136
      %p138 = scmp.ne.s32.totalorder %s126, %s127
      %p139 = scmp.eq.s32.totalorder %s19, 1
      %p140 = por %p138, %p139
      %p142 = scmp.ne.s32.totalorder %s127, %s141
      %p143 = scmp.eq.s32.totalorder %s19, 0
      %p144 = por %p142, %p143
      %s146 = sadd.s32 %s145, 1
      %p149 = scmp.eq.s32.totalorder %s13, 1
      %p150 = scmp.ne.s32.totalorder %s145, %s147
      %p151 = scmp.eq.s32.totalorder %s13, 0
      %p152 = por %p150, %p151
      %p153 = scmp.ne.s32.totalorder %s145, %s147
      %p154 = scmp.eq.s32.totalorder %s18, 1
      %p155 = por %p153, %p154
      %p156 = scmp.ne.s32.totalorder %s147, %s148
      %p157 = scmp.eq.s32.totalorder %s18, 0
      %p158 = por %p156, %p157
      %p159 = scmp.ne.s32.totalorder %s147, %s148
      %p160 = scmp.eq.s32.totalorder %s19, 1
      %p161 = por %p159, %p160
      %p163 = scmp.ne.s32.totalorder %s148, %s162
      %p164 = scmp.eq.s32.totalorder %s19, 0
      %p165 = por %p163, %p164
      %s166 = ssub.s32 %s20, %s32
      %p167 = scmp.eq.s32.totalorder %s166, 0
      %s169 = sadd.s32 %s168, 1
      %s170 = scalar_select %p167, %s168, %s169
      %p173 = pneg %p167
      %p174 = scmp.eq.s32.totalorder %s13, 1
      %p175 = por %p173, %p174
      %p176 = scmp.ne.s32.totalorder %s168, %s171
      %p177 = scmp.eq.s32.totalorder %s13, 0
      %p178 = por %p176, %p177
      %p179 = scmp.ne.s32.totalorder %s168, %s171
      %p180 = scmp.eq.s32.totalorder %s18, 1
      %p181 = por %p179, %p180
      %p182 = scmp.ne.s32.totalorder %s171, %s172
      %p183 = scmp.eq.s32.totalorder %s18, 0
      %p184 = por %p182, %p183
      %p185 = scmp.ne.s32.totalorder %s171, %s172
      %p186 = scmp.eq.s32.totalorder %s19, 1
      %p187 = por %p185, %p186
      %p189 = scmp.ne.s32.totalorder %s172, %s188
      %p190 = scmp.eq.s32.totalorder %s19, 0
      %p191 = por %p189, %p190
      %p192 = scmp.le.s32.totalorder 1, %s13
      %p193 = scmp.lt.s32.totalorder %s13, 3
      %p194 = pnand %p192, %p193
      %p195 = pneg %p194
      // Predicated region
      $region9: #{tpu_custom_call.1} parent=5 // pred_check
        _
      $region10: #{tpu_custom_call.1} parent=5 // pred_check_branch
        %197 = sbr.rel (%p194) target = $region12
      $region11: #{tpu_custom_call.1} parent=5 // pred_region
        %s198 = ssub.s32 %s13, 1
        // Predicated region
        $region13: #{tpu_custom_call.1} parent=11 // pred_check
          %p199 = pneg %p74
        $region14: #{tpu_custom_call.1} parent=11 // pred_check_branch
          %201 = sbr.rel (%p199) target = $region16
        $region15: #{tpu_custom_call.1} parent=11 // pred_region
          _
        $region16: #{tpu_custom_call.1} parent=11 // pred_fallthru
          _
        // Predicated region
        $region17: #{tpu_custom_call.1} parent=11 // pred_check
          %p202 = pneg %p95
        $region18: #{tpu_custom_call.1} parent=11 // pred_check_branch
          %204 = sbr.rel (%p202) target = $region20
        $region19: #{tpu_custom_call.1} parent=11 // pred_region
          _
        $region20: #{tpu_custom_call.1} parent=11 // pred_fallthru
          _
        // Predicated region
        $region21: #{tpu_custom_call.1} parent=11 // pred_check
          %p205 = pneg %p116
        $region22: #{tpu_custom_call.1} parent=11 // pred_check_branch
          %207 = sbr.rel (%p205) target = $region24
        $region23: #{tpu_custom_call.1} parent=11 // pred_region
          _
        $region24: #{tpu_custom_call.1} parent=11 // pred_fallthru
          _
        // Predicated region
        $region25: #{tpu_custom_call.1} parent=11 // pred_check
          %p208 = pneg %p137
        $region26: #{tpu_custom_call.1} parent=11 // pred_check_branch
          %210 = sbr.rel (%p208) target = $region28
        $region27: #{tpu_custom_call.1} parent=11 // pred_region
          _
        $region28: #{tpu_custom_call.1} parent=11 // pred_fallthru
          _
        // Predicated region
        $region29: #{tpu_custom_call.1} parent=11 // pred_check
          %p211 = pneg %p158
        $region30: #{tpu_custom_call.1} parent=11 // pred_check_branch
          %213 = sbr.rel (%p211) target = $region32
        $region31: #{tpu_custom_call.1} parent=11 // pred_region
          _
        $region32: #{tpu_custom_call.1} parent=11 // pred_fallthru
          _
      $region12: #{tpu_custom_call.1} parent=5 // pred_fallthru
        _
      %p214 = scmp.lt.s32.totalorder %s13, 2
      // Predicated region
      $region33: #{tpu_custom_call.1} parent=5 // pred_check
        %p215 = pneg %p214
      $region34: #{tpu_custom_call.1} parent=5 // pred_check_branch
        %217 = sbr.rel (%p215) target = $region36
      $region35: #{tpu_custom_call.1} parent=5 // pred_region
        // Predicated region
        $region37: #{tpu_custom_call.1} parent=35 // pred_check
          %p218 = pneg %p47
        $region38: #{tpu_custom_call.1} parent=35 // pred_check_branch
          %220 = sbr.rel (%p218) target = $region40
        $region39: #{tpu_custom_call.1} parent=35 // pred_region
          %s221 = smul.u32 8, %s21
          %p222 = scmp.lt.s32.totalorder %s221, 15
          %s223 = scalar_select %p222, %s221, 15
          %p224 = scmp.lt.s32.totalorder %s20, 0
          %s225 = scalar_select %p224, %s20, 0
          %s226 = sadd.s32 %s225, %s223
          %s227 = smul.addr %s226, 8
          %s228 = scalar_lea.vmem %s0, %s227
          %s229 = smul.u32 8, %s21
        $region40: #{tpu_custom_call.1} parent=35 // pred_fallthru
          _
      $region36: #{tpu_custom_call.1} parent=5 // pred_fallthru
        _
      %p230 = scmp.le.s32.totalorder 1, %s13
      %p231 = scmp.lt.s32.totalorder %s13, 3
      %p232 = pnand %p230, %p231
      %p233 = pneg %p232
      // Predicated region
      $region41: #{tpu_custom_call.1} parent=5 // pred_check
        _
      $region42: #{tpu_custom_call.1} parent=5 // pred_check_branch
        %235 = sbr.rel (%p232) target = $region44
      $region43: #{tpu_custom_call.1} parent=5 // pred_region
        %s236 = ssub.s32 %s13, 1
        %s237 = smul.u32 8, %s23
        %p238 = scmp.lt.s32.totalorder %s237, 15
        %s239 = scalar_select %p238, %s237, 15
        %p240 = scmp.lt.s32.totalorder %s22, 0
        %s241 = scalar_select %p240, %s22, 0
        %s242 = sadd.s32 %s241, %s239
        %s243 = smul.addr %s242, 8
        %s244 = scalar_lea.vmem %s0, %s243
        %p245 = pneg %p53
        %p246 = pneg %p50
        %p247 = pneg %p74
        %p248 = pneg %p71
        %p249 = pneg %p95
        %p250 = pneg %p92
        %p251 = pneg %p116
        %p252 = pneg %p113
        %p253 = pneg %p137
        %p254 = pneg %p134
        %p255 = pneg %p158
        %p256 = pneg %p155
        %p257 = pneg %p184
        %p258 = pneg %p181
        %s259 = smul.u32 8, %s23
        %p260 = scmp.lt.s32.totalorder %s259, 15
        %s261 = scalar_select %p260, %s259, 15
        %p262 = scmp.lt.s32.totalorder %s22, 0
        %s263 = scalar_select %p262, %s22, 0
        %s264 = sadd.s32 %s263, %s261
        %s265 = smul.addr %s264, 8
        %s266 = scalar_lea.vmem %s0, %s265
        %s267 = smul.u32 8, %s23
        %p268 = scmp.eq.s32.totalorder %s23, 0
        // Predicated region
        $region45: #{tpu_custom_call.1} parent=43 // pred_check
          %p269 = pneg %p268
        $region46: #{tpu_custom_call.1} parent=43 // pred_check_branch
          %271 = sbr.rel (%p269) target = $region48
        $region47: #{tpu_custom_call.1} parent=43 // pred_region
          %272 = vst [vmem:[#allocation2] sm:$0xff] 0.0
        $region48: #{tpu_custom_call.1} parent=43 // pred_fallthru
          _
        %v273 = vld [vmem:[%s266] sm:$0xff]
        %v274 = vld [vmem:[%s266 + $0x8] sm:$0xff]
        %v275 = vld [vmem:[%s266 + $0x10] sm:$0xff]
        %v276 = vld [vmem:[%s266 + $0x18] sm:$0xff]
        %v277 = vld [vmem:[%s266 + $0x20] sm:$0xff]
        %v278 = vld [vmem:[%s266 + $0x28] sm:$0xff]
        %v279 = vld [vmem:[%s266 + $0x30] sm:$0xff]
        %v280 = vld [vmem:[%s266 + $0x38] sm:$0xff]
        %v281 = vld [vmem:[%s1] sm:$0xf]
        %v282 = vld [vmem:[%s2] sm:$0x1]
        %v284 = vlaneseq
        %v285 = vshrl.u32 %v284, 7
        %v286 = vsub.s32 0, %v285
        %v287 = vrot.slane %v282, %v286
        %vm289 = vcmask 31744
        %v291 = vsel %vm289, %v273, 0
        %v294 = vsel %vm289, %v274, 0
        %v297 = vsel %vm289, %v275, 0
        %v300 = vsel %vm289, %v276, 0
        %v303 = vsel %vm289, %v277, 0
        %v306 = vsel %vm289, %v278, 0
        %v309 = vsel %vm289, %v279, 0
        %v312 = vsel %vm289, %v280, 0
        %vm314 = vcmask 1043456
        %v316 = vsel %vm314, %v281, 0
        %318 = vmatprep.subr.mxu0 0.0
        %319 = vmatpush1.msra.mxu0 0.0
        %320 = vmatprep.subr.mxu0 0.0
        %321 = vmatpush1.msra.mxu0 0.0
        %322 = vmatprep.subr.mxu0 0.0
        %323 = vmatpush1.msra.mxu0 0.0
        %324 = vmatprep.subr.mxu0 0.0
        %325 = vmatpush1.msra.mxu0 0.0
        %326 = vmatprep.subr.mxu0 0.0
        %327 = vmatpush1.msra.mxu0 0.0
        %328 = vmatprep.subr.mxu0 0.0
        %329 = vmatpush1.msra.mxu0 0.0
        %330 = vmatprep.subr.mxu0 0.0
        %331 = vmatpush1.msra.mxu0 0.0
        %332 = vmatprep.subr.mxu0 0.0
        %333 = vmatpush1.msra.mxu0 0.0
        %334 = vmatprep.subr.mxu0 0.0
        %335 = vmatpush1.msra.mxu0 0.0
        %336 = vmatprep.subr.mxu0 0.0
        %337 = vmatpush1.msra.mxu0 0.0
        %338 = vmatprep.subr.mxu0 0.0
        %339 = vmatpush1.msra.mxu0 0.0
        %340 = vmatprep.subr.mxu0 0.0
        %341 = vmatpush1.msra.mxu0 0.0
        %342 = vmatprep.subr.mxu0 0.0
        %343 = vmatpush1.msra.mxu0 0.0
        %344 = vmatprep.subr.mxu0 0.0
        %345 = vmatpush1.msra.mxu0 0.0
        %346 = vmatprep.subr.mxu0 0.0
        %347 = vmatpush1.msra.mxu0 0.0
        %348 = vmatprep.subr.mxu0 0.0
        %349 = vmatpush1.msra.mxu0 %v316
        %350 = vmatprep.subr.mxu0 0.0
        %351 = vmatpush2.msra.mxu0 0.0
        %352 = vmatprep.subr.mxu0 0.0
        %353 = vmatpush2.msra.mxu0 0.0
        %354 = vmatprep.subr.mxu0 0.0
        %355 = vmatpush2.msra.mxu0 0.0
        %356 = vmatprep.subr.mxu0 0.0
        %357 = vmatpush2.msra.mxu0 0.0
        %358 = vmatprep.subr.mxu0 0.0
        %359 = vmatpush2.msra.mxu0 0.0
        %360 = vmatprep.subr.mxu0 0.0
        %361 = vmatpush2.msra.mxu0 0.0
        %362 = vmatprep.subr.mxu0 0.0
        %363 = vmatpush2.msra.mxu0 0.0
        %364 = vmatprep.subr.mxu0 0.0
        %365 = vmatpush2.msra.mxu0 0.0
        %366 = vmatprep.subr.mxu0 0.0
        %367 = vmatpush2.msra.mxu0 0.0
        %368 = vmatprep.subr.mxu0 0.0
        %369 = vmatpush2.msra.mxu0 0.0
        %370 = vmatprep.subr.mxu0 0.0
        %371 = vmatpush2.msra.mxu0 0.0
        %372 = vmatprep.subr.mxu0 0.0
        %373 = vmatpush2.msra.mxu0 0.0
        %374 = vmatprep.subr.mxu0 0.0
        %375 = vmatpush2.msra.mxu0 0.0
        %376 = vmatprep.subr.mxu0 0.0
        %377 = vmatpush2.msra.mxu0 0.0
        %378 = vmatprep.subr.mxu0 0.0
        %379 = vmatpush2.msra.mxu0 0.0
        %380 = vmatprep.subr.mxu0 0.0
        %381 = vmatpush2.msra.mxu0 0.0
        %382 = vmatprep.mubr.f32.mxu0 0.0
        %383 = vmatmul.mubr.f32.gmra.mxu0 %v291
        %v384 = vpop.f32.mrf.mxu0
        %v385 = vadd.f32 %v287, %v384
        %v386 = vpop.f32.mrf.mxu0
        %387 = vmatprep.mubr.f32.mxu0 0.0
        %388 = vmatmul.mubr.f32.gmra.mxu0 %v294
        %v389 = vpop.f32.mrf.mxu0
        %v390 = vadd.f32 %v287, %v389
        %v391 = vpop.f32.mrf.mxu0
        %392 = vmatprep.mubr.f32.mxu0 0.0
        %393 = vmatmul.mubr.f32.gmra.mxu0 %v297
        %v394 = vpop.f32.mrf.mxu0
        %v395 = vadd.f32 %v287, %v394
        %v396 = vpop.f32.mrf.mxu0
        %397 = vmatprep.mubr.f32.mxu0 0.0
        %398 = vmatmul.mubr.f32.gmra.mxu0 %v300
        %v399 = vpop.f32.mrf.mxu0
        %v400 = vadd.f32 %v287, %v399
        %v401 = vpop.f32.mrf.mxu0
        %402 = vmatprep.mubr.f32.mxu0 0.0
        %403 = vmatmul.mubr.f32.gmra.mxu0 %v303
        %v404 = vpop.f32.mrf.mxu0
        %v405 = vadd.f32 %v287, %v404
        %v406 = vpop.f32.mrf.mxu0
        %407 = vmatprep.mubr.f32.mxu0 0.0
        %408 = vmatmul.mubr.f32.gmra.mxu0 %v306
        %v409 = vpop.f32.mrf.mxu0
        %v410 = vadd.f32 %v287, %v409
        %v411 = vpop.f32.mrf.mxu0
        %412 = vmatprep.mubr.f32.mxu0 0.0
        %413 = vmatmul.mubr.f32.gmra.mxu0 %v309
        %v414 = vpop.f32.mrf.mxu0
        %v415 = vadd.f32 %v287, %v414
        %v416 = vpop.f32.mrf.mxu0
        %417 = vmatprep.mubr.f32.mxu0 0.0
        %418 = vmatmul.mubr.f32.gmra.mxu0 %v312
        %v419 = vpop.f32.mrf.mxu0
        %v420 = vadd.f32 %v287, %v419
        %v421 = vpop.f32.mrf.mxu0
        %422 = vdwg.mxu0
        %423 = vst [vmem:[#allocation3] sm:$0xff] %v385
        %424 = vst [vmem:[#allocation3 + $0x8] sm:$0xff] %v390
        %425 = vst [vmem:[#allocation3 + $0x10] sm:$0xff] %v395
        %426 = vst [vmem:[#allocation3 + $0x18] sm:$0xff] %v400
        %427 = vst [vmem:[#allocation3 + $0x20] sm:$0xff] %v405
        %428 = vst [vmem:[#allocation3 + $0x28] sm:$0xff] %v410
        %429 = vst [vmem:[#allocation3 + $0x30] sm:$0xff] %v415
        %430 = vst [vmem:[#allocation3 + $0x38] sm:$0xff] %v420
        %v431 = vld [vmem:[%s3] sm:$0xff]
        %v432 = vld [vmem:[%s3 + $0x8] sm:$0xff]
        %v433 = vld [vmem:[%s3 + $0x10] sm:$0xff]
        %v434 = vld [vmem:[%s3 + $0x18] sm:$0xff]
        %v435 = vld [vmem:[%s3 + $0x20] sm:$0xff]
        %v436 = vld [vmem:[%s3 + $0x28] sm:$0xff]
        %v437 = vld [vmem:[%s3 + $0x30] sm:$0xff]
        %v438 = vld [vmem:[%s3 + $0x38] sm:$0xff]
        %v439 = vld [vmem:[%s3 + $0x40] sm:$0xff]
        %v440 = vld [vmem:[%s3 + $0x48] sm:$0xff]
        %v441 = vld [vmem:[%s3 + $0x50] sm:$0xff]
        %v442 = vld [vmem:[%s3 + $0x58] sm:$0xff]
        %v443 = vld [vmem:[%s3 + $0x60] sm:$0xff]
        %v444 = vld [vmem:[%s3 + $0x68] sm:$0xff]
        %v445 = vld [vmem:[%s3 + $0x70] sm:$0xff]
        %v446 = vld [vmem:[%s3 + $0x78] sm:$0xff]
        %v447 = vld [vmem:[#allocation2] sm:$0xff]
        %v448 = vld [vmem:[#allocation3] sm:$0xff]
        %449 = vmatprep.subr.mxu0 0.0
        %450 = vmatpush1.msra.mxu0 %v446
        %451 = vmatprep.subr.mxu0 0.0
        %452 = vmatpush1.msra.mxu0 %v445
        %453 = vmatprep.subr.mxu0 0.0
        %454 = vmatpush1.msra.mxu0 %v444
        %455 = vmatprep.subr.mxu0 0.0
        %456 = vmatpush1.msra.mxu0 %v443
        %457 = vmatprep.subr.mxu0 0.0
        %458 = vmatpush1.msra.mxu0 %v442
        %459 = vmatprep.subr.mxu0 0.0
        %460 = vmatpush1.msra.mxu0 %v441
        %461 = vmatprep.subr.mxu0 0.0
        %462 = vmatpush1.msra.mxu0 %v440
        %463 = vmatprep.subr.mxu0 0.0
        %464 = vmatpush1.msra.mxu0 %v439
        %465 = vmatprep.subr.mxu0 0.0
        %466 = vmatpush1.msra.mxu0 %v438
        %467 = vmatprep.subr.mxu0 0.0
        %468 = vmatpush1.msra.mxu0 %v437
        %469 = vmatprep.subr.mxu0 0.0
        %470 = vmatpush1.msra.mxu0 %v436
        %471 = vmatprep.subr.mxu0 0.0
        %472 = vmatpush1.msra.mxu0 %v435
        %473 = vmatprep.subr.mxu0 0.0
        %474 = vmatpush1.msra.mxu0 %v434
        %475 = vmatprep.subr.mxu0 0.0
        %476 = vmatpush1.msra.mxu0 %v433
        %477 = vmatprep.subr.mxu0 0.0
        %478 = vmatpush1.msra.mxu0 %v432
        %479 = vmatprep.subr.mxu0 0.0
        %480 = vmatpush1.msra.mxu0 %v431
        %481 = vmatprep.subr.mxu0 0.0
        %482 = vmatpush2.msra.mxu0 0.0
        %483 = vmatprep.subr.mxu0 0.0
        %484 = vmatpush2.msra.mxu0 0.0
        %485 = vmatprep.subr.mxu0 0.0
        %486 = vmatpush2.msra.mxu0 0.0
        %487 = vmatprep.subr.mxu0 0.0
        %488 = vmatpush2.msra.mxu0 0.0
        %489 = vmatprep.subr.mxu0 0.0
        %490 = vmatpush2.msra.mxu0 0.0
        %491 = vmatprep.subr.mxu0 0.0
        %492 = vmatpush2.msra.mxu0 0.0
        %493 = vmatprep.subr.mxu0 0.0
        %494 = vmatpush2.msra.mxu0 0.0
        %495 = vmatprep.subr.mxu0 0.0
        %496 = vmatpush2.msra.mxu0 0.0
        %497 = vmatprep.subr.mxu0 0.0
        %498 = vmatpush2.msra.mxu0 0.0
        %499 = vmatprep.subr.mxu0 0.0
        %500 = vmatpush2.msra.mxu0 0.0
        %501 = vmatprep.subr.mxu0 0.0
        %502 = vmatpush2.msra.mxu0 0.0
        %503 = vmatprep.subr.mxu0 0.0
        %504 = vmatpush2.msra.mxu0 0.0
        %505 = vmatprep.subr.mxu0 0.0
        %506 = vmatpush2.msra.mxu0 0.0
        %507 = vmatprep.subr.mxu0 0.0
        %508 = vmatpush2.msra.mxu0 0.0
        %509 = vmatprep.subr.mxu0 0.0
        %510 = vmatpush2.msra.mxu0 0.0
        %511 = vmatprep.subr.mxu0 0.0
        %512 = vmatpush2.msra.mxu0 0.0
        %513 = vmatprep.mubr.f32.mxu0 0.0
        %514 = vmatmul.mubr.f32.gmra.mxu0 %v447
        %v515 = vpop.f32.mrf.mxu0
        %v516 = vadd.f32 %v448, %v515
        %v517 = vpop.f32.mrf.mxu0
        %518 = vdwg.mxu0
        %v519 = vtanh.pop %v516
        %v520 = vld [vmem:[#allocation3 + $0x8] sm:$0xff]
        %521 = vmatprep.subr.mxu0 0.0
        %522 = vmatpush1.msra.mxu0 %v446
        %523 = vmatprep.subr.mxu0 0.0
        %524 = vmatpush1.msra.mxu0 %v445
        %525 = vmatprep.subr.mxu0 0.0
        %526 = vmatpush1.msra.mxu0 %v444
        %527 = vmatprep.subr.mxu0 0.0
        %528 = vmatpush1.msra.mxu0 %v443
        %529 = vmatprep.subr.mxu0 0.0
        %530 = vmatpush1.msra.mxu0 %v442
        %531 = vmatprep.subr.mxu0 0.0
        %532 = vmatpush1.msra.mxu0 %v441
        %533 = vmatprep.subr.mxu0 0.0
        %534 = vmatpush1.msra.mxu0 %v440
        %535 = vmatprep.subr.mxu0 0.0
        %536 = vmatpush1.msra.mxu0 %v439
        %537 = vmatprep.subr.mxu0 0.0
        %538 = vmatpush1.msra.mxu0 %v438
        %539 = vmatprep.subr.mxu0 0.0
        %540 = vmatpush1.msra.mxu0 %v437
        %541 = vmatprep.subr.mxu0 0.0
        %542 = vmatpush1.msra.mxu0 %v436
        %543 = vmatprep.subr.mxu0 0.0
        %544 = vmatpush1.msra.mxu0 %v435
        %545 = vmatprep.subr.mxu0 0.0
        %546 = vmatpush1.msra.mxu0 %v434
        %547 = vmatprep.subr.mxu0 0.0
        %548 = vmatpush1.msra.mxu0 %v433
        %549 = vmatprep.subr.mxu0 0.0
        %550 = vmatpush1.msra.mxu0 %v432
        %551 = vmatprep.subr.mxu0 0.0
        %552 = vmatpush1.msra.mxu0 %v431
        %553 = vmatprep.subr.mxu0 0.0
        %554 = vmatpush2.msra.mxu0 0.0
        %555 = vmatprep.subr.mxu0 0.0
        %556 = vmatpush2.msra.mxu0 0.0
        %557 = vmatprep.subr.mxu0 0.0
        %558 = vmatpush2.msra.mxu0 0.0
        %559 = vmatprep.subr.mxu0 0.0
        %560 = vmatpush2.msra.mxu0 0.0
        %561 = vmatprep.subr.mxu0 0.0
        %562 = vmatpush2.msra.mxu0 0.0
        %563 = vmatprep.subr.mxu0 0.0
        %564 = vmatpush2.msra.mxu0 0.0
        %565 = vmatprep.subr.mxu0 0.0
        %566 = vmatpush2.msra.mxu0 0.0
        %567 = vmatprep.subr.mxu0 0.0
        %568 = vmatpush2.msra.mxu0 0.0
        %569 = vmatprep.subr.mxu0 0.0
        %570 = vmatpush2.msra.mxu0 0.0
        %571 = vmatprep.subr.mxu0 0.0
        %572 = vmatpush2.msra.mxu0 0.0
        %573 = vmatprep.subr.mxu0 0.0
        %574 = vmatpush2.msra.mxu0 0.0
        %575 = vmatprep.subr.mxu0 0.0
        %576 = vmatpush2.msra.mxu0 0.0
        %577 = vmatprep.subr.mxu0 0.0
        %578 = vmatpush2.msra.mxu0 0.0
        %579 = vmatprep.subr.mxu0 0.0
        %580 = vmatpush2.msra.mxu0 0.0
        %581 = vmatprep.subr.mxu0 0.0
        %582 = vmatpush2.msra.mxu0 0.0
        %583 = vmatprep.subr.mxu0 0.0
        %584 = vmatpush2.msra.mxu0 0.0
        %585 = vmatprep.mubr.f32.mxu0 0.0
        %586 = vmatmul.mubr.f32.gmra.mxu0 %v519
        %v587 = vpop.f32.mrf.mxu0
        %v588 = vadd.f32 %v520, %v587
        %v589 = vpop.f32.mrf.mxu0
        %590 = vdwg.mxu0
        %v591 = vtanh.pop %v588
        %v592 = vld [vmem:[#allocation3 + $0x10] sm:$0xff]
        %593 = vmatprep.subr.mxu0 0.0
        %594 = vmatpush1.msra.mxu0 %v446
        %595 = vmatprep.subr.mxu0 0.0
        %596 = vmatpush1.msra.mxu0 %v445
        %597 = vmatprep.subr.mxu0 0.0
        %598 = vmatpush1.msra.mxu0 %v444
        %599 = vmatprep.subr.mxu0 0.0
        %600 = vmatpush1.msra.mxu0 %v443
        %601 = vmatprep.subr.mxu0 0.0
        %602 = vmatpush1.msra.mxu0 %v442
        %603 = vmatprep.subr.mxu0 0.0
        %604 = vmatpush1.msra.mxu0 %v441
        %605 = vmatprep.subr.mxu0 0.0
        %606 = vmatpush1.msra.mxu0 %v440
        %607 = vmatprep.subr.mxu0 0.0
        %608 = vmatpush1.msra.mxu0 %v439
        %609 = vmatprep.subr.mxu0 0.0
        %610 = vmatpush1.msra.mxu0 %v438
        %611 = vmatprep.subr.mxu0 0.0
        %612 = vmatpush1.msra.mxu0 %v437
        %613 = vmatprep.subr.mxu0 0.0
        %614 = vmatpush1.msra.mxu0 %v436
        %615 = vmatprep.subr.mxu0 0.0
        %616 = vmatpush1.msra.mxu0 %v435
        %617 = vmatprep.subr.mxu0 0.0
        %618 = vmatpush1.msra.mxu0 %v434
        %619 = vmatprep.subr.mxu0 0.0
        %620 = vmatpush1.msra.mxu0 %v433
        %621 = vmatprep.subr.mxu0 0.0
        %622 = vmatpush1.msra.mxu0 %v432
        %623 = vmatprep.subr.mxu0 0.0
        %624 = vmatpush1.msra.mxu0 %v431
        %625 = vmatprep.subr.mxu0 0.0
        %626 = vmatpush2.msra.mxu0 0.0
        %627 = vmatprep.subr.mxu0 0.0
        %628 = vmatpush2.msra.mxu0 0.0
        %629 = vmatprep.subr.mxu0 0.0
        %630 = vmatpush2.msra.mxu0 0.0
        %631 = vmatprep.subr.mxu0 0.0
        %632 = vmatpush2.msra.mxu0 0.0
        %633 = vmatprep.subr.mxu0 0.0
        %634 = vmatpush2.msra.mxu0 0.0
        %635 = vmatprep.subr.mxu0 0.0
        %636 = vmatpush2.msra.mxu0 0.0
        %637 = vmatprep.subr.mxu0 0.0
        %638 = vmatpush2.msra.mxu0 0.0
        %639 = vmatprep.subr.mxu0 0.0
        %640 = vmatpush2.msra.mxu0 0.0
        %641 = vmatprep.subr.mxu0 0.0
        %642 = vmatpush2.msra.mxu0 0.0
        %643 = vmatprep.subr.mxu0 0.0
        %644 = vmatpush2.msra.mxu0 0.0
        %645 = vmatprep.subr.mxu0 0.0
        %646 = vmatpush2.msra.mxu0 0.0
        %647 = vmatprep.subr.mxu0 0.0
        %648 = vmatpush2.msra.mxu0 0.0
        %649 = vmatprep.subr.mxu0 0.0
        %650 = vmatpush2.msra.mxu0 0.0
        %651 = vmatprep.subr.mxu0 0.0
        %652 = vmatpush2.msra.mxu0 0.0
        %653 = vmatprep.subr.mxu0 0.0
        %654 = vmatpush2.msra.mxu0 0.0
        %655 = vmatprep.subr.mxu0 0.0
        %656 = vmatpush2.msra.mxu0 0.0
        %657 = vmatprep.mubr.f32.mxu0 0.0
        %658 = vmatmul.mubr.f32.gmra.mxu0 %v591
        %v659 = vpop.f32.mrf.mxu0
        %v660 = vadd.f32 %v592, %v659
        %v661 = vpop.f32.mrf.mxu0
        %662 = vdwg.mxu0
        %v663 = vtanh.pop %v660
        %v664 = vld [vmem:[#allocation3 + $0x18] sm:$0xff]
        %665 = vmatprep.subr.mxu0 0.0
        %666 = vmatpush1.msra.mxu0 %v446
        %667 = vmatprep.subr.mxu0 0.0
        %668 = vmatpush1.msra.mxu0 %v445
        %669 = vmatprep.subr.mxu0 0.0
        %670 = vmatpush1.msra.mxu0 %v444
        %671 = vmatprep.subr.mxu0 0.0
        %672 = vmatpush1.msra.mxu0 %v443
        %673 = vmatprep.subr.mxu0 0.0
        %674 = vmatpush1.msra.mxu0 %v442
        %675 = vmatprep.subr.mxu0 0.0
        %676 = vmatpush1.msra.mxu0 %v441
        %677 = vmatprep.subr.mxu0 0.0
        %678 = vmatpush1.msra.mxu0 %v440
        %679 = vmatprep.subr.mxu0 0.0
        %680 = vmatpush1.msra.mxu0 %v439
        %681 = vmatprep.subr.mxu0 0.0
        %682 = vmatpush1.msra.mxu0 %v438
        %683 = vmatprep.subr.mxu0 0.0
        %684 = vmatpush1.msra.mxu0 %v437
        %685 = vmatprep.subr.mxu0 0.0
        %686 = vmatpush1.msra.mxu0 %v436
        %687 = vmatprep.subr.mxu0 0.0
        %688 = vmatpush1.msra.mxu0 %v435
        %689 = vmatprep.subr.mxu0 0.0
        %690 = vmatpush1.msra.mxu0 %v434
        %691 = vmatprep.subr.mxu0 0.0
        %692 = vmatpush1.msra.mxu0 %v433
        %693 = vmatprep.subr.mxu0 0.0
        %694 = vmatpush1.msra.mxu0 %v432
        %695 = vmatprep.subr.mxu0 0.0
        %696 = vmatpush1.msra.mxu0 %v431
        %697 = vmatprep.subr.mxu0 0.0
        %698 = vmatpush2.msra.mxu0 0.0
        %699 = vmatprep.subr.mxu0 0.0
        %700 = vmatpush2.msra.mxu0 0.0
        %701 = vmatprep.subr.mxu0 0.0
        %702 = vmatpush2.msra.mxu0 0.0
        %703 = vmatprep.subr.mxu0 0.0
        %704 = vmatpush2.msra.mxu0 0.0
        %705 = vmatprep.subr.mxu0 0.0
        %706 = vmatpush2.msra.mxu0 0.0
        %707 = vmatprep.subr.mxu0 0.0
        %708 = vmatpush2.msra.mxu0 0.0
        %709 = vmatprep.subr.mxu0 0.0
        %710 = vmatpush2.msra.mxu0 0.0
        %711 = vmatprep.subr.mxu0 0.0
        %712 = vmatpush2.msra.mxu0 0.0
        %713 = vmatprep.subr.mxu0 0.0
        %714 = vmatpush2.msra.mxu0 0.0
        %715 = vmatprep.subr.mxu0 0.0
        %716 = vmatpush2.msra.mxu0 0.0
        %717 = vmatprep.subr.mxu0 0.0
        %718 = vmatpush2.msra.mxu0 0.0
        %719 = vmatprep.subr.mxu0 0.0
        %720 = vmatpush2.msra.mxu0 0.0
        %721 = vmatprep.subr.mxu0 0.0
        %722 = vmatpush2.msra.mxu0 0.0
        %723 = vmatprep.subr.mxu0 0.0
        %724 = vmatpush2.msra.mxu0 0.0
        %725 = vmatprep.subr.mxu0 0.0
        %726 = vmatpush2.msra.mxu0 0.0
        %727 = vmatprep.subr.mxu0 0.0
        %728 = vmatpush2.msra.mxu0 0.0
        %729 = vmatprep.mubr.f32.mxu0 0.0
        %730 = vmatmul.mubr.f32.gmra.mxu0 %v663
        %v731 = vpop.f32.mrf.mxu0
        %v732 = vadd.f32 %v664, %v731
        %v733 = vpop.f32.mrf.mxu0
        %734 = vdwg.mxu0
        %v735 = vtanh.pop %v732
        %v736 = vld [vmem:[#allocation3 + $0x20] sm:$0xff]
        %737 = vmatprep.subr.mxu0 0.0
        %738 = vmatpush1.msra.mxu0 %v446
        %739 = vmatprep.subr.mxu0 0.0
        %740 = vmatpush1.msra.mxu0 %v445
        %741 = vmatprep.subr.mxu0 0.0
        %742 = vmatpush1.msra.mxu0 %v444
        %743 = vmatprep.subr.mxu0 0.0
        %744 = vmatpush1.msra.mxu0 %v443
        %745 = vmatprep.subr.mxu0 0.0
        %746 = vmatpush1.msra.mxu0 %v442
        %747 = vmatprep.subr.mxu0 0.0
        %748 = vmatpush1.msra.mxu0 %v441
        %749 = vmatprep.subr.mxu0 0.0
        %750 = vmatpush1.msra.mxu0 %v440
        %751 = vmatprep.subr.mxu0 0.0
        %752 = vmatpush1.msra.mxu0 %v439
        %753 = vmatprep.subr.mxu0 0.0
        %754 = vmatpush1.msra.mxu0 %v438
        %755 = vmatprep.subr.mxu0 0.0
        %756 = vmatpush1.msra.mxu0 %v437
        %757 = vmatprep.subr.mxu0 0.0
        %758 = vmatpush1.msra.mxu0 %v436
        %759 = vmatprep.subr.mxu0 0.0
        %760 = vmatpush1.msra.mxu0 %v435
        %761 = vmatprep.subr.mxu0 0.0
        %762 = vmatpush1.msra.mxu0 %v434
        %763 = vmatprep.subr.mxu0 0.0
        %764 = vmatpush1.msra.mxu0 %v433
        %765 = vmatprep.subr.mxu0 0.0
        %766 = vmatpush1.msra.mxu0 %v432
        %767 = vmatprep.subr.mxu0 0.0
        %768 = vmatpush1.msra.mxu0 %v431
        %769 = vmatprep.subr.mxu0 0.0
        %770 = vmatpush2.msra.mxu0 0.0
        %771 = vmatprep.subr.mxu0 0.0
        %772 = vmatpush2.msra.mxu0 0.0
        %773 = vmatprep.subr.mxu0 0.0
        %774 = vmatpush2.msra.mxu0 0.0
        %775 = vmatprep.subr.mxu0 0.0
        %776 = vmatpush2.msra.mxu0 0.0
        %777 = vmatprep.subr.mxu0 0.0
        %778 = vmatpush2.msra.mxu0 0.0
        %779 = vmatprep.subr.mxu0 0.0
        %780 = vmatpush2.msra.mxu0 0.0
        %781 = vmatprep.subr.mxu0 0.0
        %782 = vmatpush2.msra.mxu0 0.0
        %783 = vmatprep.subr.mxu0 0.0
        %784 = vmatpush2.msra.mxu0 0.0
        %785 = vmatprep.subr.mxu0 0.0
        %786 = vmatpush2.msra.mxu0 0.0
        %787 = vmatprep.subr.mxu0 0.0
        %788 = vmatpush2.msra.mxu0 0.0
        %789 = vmatprep.subr.mxu0 0.0
        %790 = vmatpush2.msra.mxu0 0.0
        %791 = vmatprep.subr.mxu0 0.0
        %792 = vmatpush2.msra.mxu0 0.0
        %793 = vmatprep.subr.mxu0 0.0
        %794 = vmatpush2.msra.mxu0 0.0
        %795 = vmatprep.subr.mxu0 0.0
        %796 = vmatpush2.msra.mxu0 0.0
        %797 = vmatprep.subr.mxu0 0.0
        %798 = vmatpush2.msra.mxu0 0.0
        %799 = vmatprep.subr.mxu0 0.0
        %800 = vmatpush2.msra.mxu0 0.0
        %801 = vmatprep.mubr.f32.mxu0 0.0
        %802 = vmatmul.mubr.f32.gmra.mxu0 %v735
        %v803 = vpop.f32.mrf.mxu0
        %v804 = vadd.f32 %v736, %v803
        %v805 = vpop.f32.mrf.mxu0
        %806 = vdwg.mxu0
        %v807 = vtanh.pop %v804
        %v808 = vld [vmem:[#allocation3 + $0x28] sm:$0xff]
        %809 = vmatprep.subr.mxu0 0.0
        %810 = vmatpush1.msra.mxu0 %v446
        %811 = vmatprep.subr.mxu0 0.0
        %812 = vmatpush1.msra.mxu0 %v445
        %813 = vmatprep.subr.mxu0 0.0
        %814 = vmatpush1.msra.mxu0 %v444
        %815 = vmatprep.subr.mxu0 0.0
        %816 = vmatpush1.msra.mxu0 %v443
        %817 = vmatprep.subr.mxu0 0.0
        %818 = vmatpush1.msra.mxu0 %v442
        %819 = vmatprep.subr.mxu0 0.0
        %820 = vmatpush1.msra.mxu0 %v441
        %821 = vmatprep.subr.mxu0 0.0
        %822 = vmatpush1.msra.mxu0 %v440
        %823 = vmatprep.subr.mxu0 0.0
        %824 = vmatpush1.msra.mxu0 %v439
        %825 = vmatprep.subr.mxu0 0.0
        %826 = vmatpush1.msra.mxu0 %v438
        %827 = vmatprep.subr.mxu0 0.0
        %828 = vmatpush1.msra.mxu0 %v437
        %829 = vmatprep.subr.mxu0 0.0
        %830 = vmatpush1.msra.mxu0 %v436
        %831 = vmatprep.subr.mxu0 0.0
        %832 = vmatpush1.msra.mxu0 %v435
        %833 = vmatprep.subr.mxu0 0.0
        %834 = vmatpush1.msra.mxu0 %v434
        %835 = vmatprep.subr.mxu0 0.0
        %836 = vmatpush1.msra.mxu0 %v433
        %837 = vmatprep.subr.mxu0 0.0
        %838 = vmatpush1.msra.mxu0 %v432
        %839 = vmatprep.subr.mxu0 0.0
        %840 = vmatpush1.msra.mxu0 %v431
        %841 = vmatprep.subr.mxu0 0.0
        %842 = vmatpush2.msra.mxu0 0.0
        %843 = vmatprep.subr.mxu0 0.0
        %844 = vmatpush2.msra.mxu0 0.0
        %845 = vmatprep.subr.mxu0 0.0
        %846 = vmatpush2.msra.mxu0 0.0
        %847 = vmatprep.subr.mxu0 0.0
        %848 = vmatpush2.msra.mxu0 0.0
        %849 = vmatprep.subr.mxu0 0.0
        %850 = vmatpush2.msra.mxu0 0.0
        %851 = vmatprep.subr.mxu0 0.0
        %852 = vmatpush2.msra.mxu0 0.0
        %853 = vmatprep.subr.mxu0 0.0
        %854 = vmatpush2.msra.mxu0 0.0
        %855 = vmatprep.subr.mxu0 0.0
        %856 = vmatpush2.msra.mxu0 0.0
        %857 = vmatprep.subr.mxu0 0.0
        %858 = vmatpush2.msra.mxu0 0.0
        %859 = vmatprep.subr.mxu0 0.0
        %860 = vmatpush2.msra.mxu0 0.0
        %861 = vmatprep.subr.mxu0 0.0
        %862 = vmatpush2.msra.mxu0 0.0
        %863 = vmatprep.subr.mxu0 0.0
        %864 = vmatpush2.msra.mxu0 0.0
        %865 = vmatprep.subr.mxu0 0.0
        %866 = vmatpush2.msra.mxu0 0.0
        %867 = vmatprep.subr.mxu0 0.0
        %868 = vmatpush2.msra.mxu0 0.0
        %869 = vmatprep.subr.mxu0 0.0
        %870 = vmatpush2.msra.mxu0 0.0
        %871 = vmatprep.subr.mxu0 0.0
        %872 = vmatpush2.msra.mxu0 0.0
        %873 = vmatprep.mubr.f32.mxu0 0.0
        %874 = vmatmul.mubr.f32.gmra.mxu0 %v807
        %v875 = vpop.f32.mrf.mxu0
        %v876 = vadd.f32 %v808, %v875
        %v877 = vpop.f32.mrf.mxu0
        %878 = vdwg.mxu0
        %v879 = vtanh.pop %v876
        %v880 = vld [vmem:[#allocation3 + $0x30] sm:$0xff]
        %881 = vmatprep.subr.mxu0 0.0
        %882 = vmatpush1.msra.mxu0 %v446
        %883 = vmatprep.subr.mxu0 0.0
        %884 = vmatpush1.msra.mxu0 %v445
        %885 = vmatprep.subr.mxu0 0.0
        %886 = vmatpush1.msra.mxu0 %v444
        %887 = vmatprep.subr.mxu0 0.0
        %888 = vmatpush1.msra.mxu0 %v443
        %889 = vmatprep.subr.mxu0 0.0
        %890 = vmatpush1.msra.mxu0 %v442
        %891 = vmatprep.subr.mxu0 0.0
        %892 = vmatpush1.msra.mxu0 %v441
        %893 = vmatprep.subr.mxu0 0.0
        %894 = vmatpush1.msra.mxu0 %v440
        %895 = vmatprep.subr.mxu0 0.0
        %896 = vmatpush1.msra.mxu0 %v439
        %897 = vmatprep.subr.mxu0 0.0
        %898 = vmatpush1.msra.mxu0 %v438
        %899 = vmatprep.subr.mxu0 0.0
        %900 = vmatpush1.msra.mxu0 %v437
        %901 = vmatprep.subr.mxu0 0.0
        %902 = vmatpush1.msra.mxu0 %v436
        %903 = vmatprep.subr.mxu0 0.0
        %904 = vmatpush1.msra.mxu0 %v435
        %905 = vmatprep.subr.mxu0 0.0
        %906 = vmatpush1.msra.mxu0 %v434
        %907 = vmatprep.subr.mxu0 0.0
        %908 = vmatpush1.msra.mxu0 %v433
        %909 = vmatprep.subr.mxu0 0.0
        %910 = vmatpush1.msra.mxu0 %v432
        %911 = vmatprep.subr.mxu0 0.0
        %912 = vmatpush1.msra.mxu0 %v431
        %913 = vmatprep.subr.mxu0 0.0
        %914 = vmatpush2.msra.mxu0 0.0
        %915 = vmatprep.subr.mxu0 0.0
        %916 = vmatpush2.msra.mxu0 0.0
        %917 = vmatprep.subr.mxu0 0.0
        %918 = vmatpush2.msra.mxu0 0.0
        %919 = vmatprep.subr.mxu0 0.0
        %920 = vmatpush2.msra.mxu0 0.0
        %921 = vmatprep.subr.mxu0 0.0
        %922 = vmatpush2.msra.mxu0 0.0
        %923 = vmatprep.subr.mxu0 0.0
        %924 = vmatpush2.msra.mxu0 0.0
        %925 = vmatprep.subr.mxu0 0.0
        %926 = vmatpush2.msra.mxu0 0.0
        %927 = vmatprep.subr.mxu0 0.0
        %928 = vmatpush2.msra.mxu0 0.0
        %929 = vmatprep.subr.mxu0 0.0
        %930 = vmatpush2.msra.mxu0 0.0
        %931 = vmatprep.subr.mxu0 0.0
        %932 = vmatpush2.msra.mxu0 0.0
        %933 = vmatprep.subr.mxu0 0.0
        %934 = vmatpush2.msra.mxu0 0.0
        %935 = vmatprep.subr.mxu0 0.0
        %936 = vmatpush2.msra.mxu0 0.0
        %937 = vmatprep.subr.mxu0 0.0
        %938 = vmatpush2.msra.mxu0 0.0
        %939 = vmatprep.subr.mxu0 0.0
        %940 = vmatpush2.msra.mxu0 0.0
        %941 = vmatprep.subr.mxu0 0.0
        %942 = vmatpush2.msra.mxu0 0.0
        %943 = vmatprep.subr.mxu0 0.0
        %944 = vmatpush2.msra.mxu0 0.0
        %945 = vmatprep.mubr.f32.mxu0 0.0
        %946 = vmatmul.mubr.f32.gmra.mxu0 %v879
        %v947 = vpop.f32.mrf.mxu0
        %v948 = vadd.f32 %v880, %v947
        %v949 = vpop.f32.mrf.mxu0
        %950 = vdwg.mxu0
        %v951 = vtanh.pop %v948
        %v952 = vld [vmem:[#allocation3 + $0x38] sm:$0xff]
        %953 = vmatprep.subr.mxu0 0.0
        %954 = vmatpush1.msra.mxu0 %v446
        %955 = vmatprep.subr.mxu0 0.0
        %956 = vmatpush1.msra.mxu0 %v445
        %957 = vmatprep.subr.mxu0 0.0
        %958 = vmatpush1.msra.mxu0 %v444
        %959 = vmatprep.subr.mxu0 0.0
        %960 = vmatpush1.msra.mxu0 %v443
        %961 = vmatprep.subr.mxu0 0.0
        %962 = vmatpush1.msra.mxu0 %v442
        %963 = vmatprep.subr.mxu0 0.0
        %964 = vmatpush1.msra.mxu0 %v441
        %965 = vmatprep.subr.mxu0 0.0
        %966 = vmatpush1.msra.mxu0 %v440
        %967 = vmatprep.subr.mxu0 0.0
        %968 = vmatpush1.msra.mxu0 %v439
        %969 = vmatprep.subr.mxu0 0.0
        %970 = vmatpush1.msra.mxu0 %v438
        %971 = vmatprep.subr.mxu0 0.0
        %972 = vmatpush1.msra.mxu0 %v437
        %973 = vmatprep.subr.mxu0 0.0
        %974 = vmatpush1.msra.mxu0 %v436
        %975 = vmatprep.subr.mxu0 0.0
        %976 = vmatpush1.msra.mxu0 %v435
        %977 = vmatprep.subr.mxu0 0.0
        %978 = vmatpush1.msra.mxu0 %v434
        %979 = vmatprep.subr.mxu0 0.0
        %980 = vmatpush1.msra.mxu0 %v433
        %981 = vmatprep.subr.mxu0 0.0
        %982 = vmatpush1.msra.mxu0 %v432
        %983 = vmatprep.subr.mxu0 0.0
        %984 = vmatpush1.msra.mxu0 %v431
        %985 = vmatprep.subr.mxu0 0.0
        %986 = vmatpush2.msra.mxu0 0.0
        %987 = vmatprep.subr.mxu0 0.0
        %988 = vmatpush2.msra.mxu0 0.0
        %989 = vmatprep.subr.mxu0 0.0
        %990 = vmatpush2.msra.mxu0 0.0
        %991 = vmatprep.subr.mxu0 0.0
        %992 = vmatpush2.msra.mxu0 0.0
        %993 = vmatprep.subr.mxu0 0.0
        %994 = vmatpush2.msra.mxu0 0.0
        %995 = vmatprep.subr.mxu0 0.0
        %996 = vmatpush2.msra.mxu0 0.0
        %997 = vmatprep.subr.mxu0 0.0
        %998 = vmatpush2.msra.mxu0 0.0
        %999 = vmatprep.subr.mxu0 0.0
        %1000 = vmatpush2.msra.mxu0 0.0
        %1001 = vmatprep.subr.mxu0 0.0
        %1002 = vmatpush2.msra.mxu0 0.0
        %1003 = vmatprep.subr.mxu0 0.0
        %1004 = vmatpush2.msra.mxu0 0.0
        %1005 = vmatprep.subr.mxu0 0.0
        %1006 = vmatpush2.msra.mxu0 0.0
        %1007 = vmatprep.subr.mxu0 0.0
        %1008 = vmatpush2.msra.mxu0 0.0
        %1009 = vmatprep.subr.mxu0 0.0
        %1010 = vmatpush2.msra.mxu0 0.0
        %1011 = vmatprep.subr.mxu0 0.0
        %1012 = vmatpush2.msra.mxu0 0.0
        %1013 = vmatprep.subr.mxu0 0.0
        %1014 = vmatpush2.msra.mxu0 0.0
        %1015 = vmatprep.subr.mxu0 0.0
        %1016 = vmatpush2.msra.mxu0 0.0
        %1017 = vmatprep.mubr.f32.mxu0 0.0
        %1018 = vmatmul.mubr.f32.gmra.mxu0 %v951
        %v1019 = vpop.f32.mrf.mxu0
        %v1020 = vadd.f32 %v952, %v1019
        %v1021 = vpop.f32.mrf.mxu0
        %1022 = vdwg.mxu0
        %v1023 = vtanh.pop %v1020
        %1024 = vst [vmem:[#allocation2] sm:$0xff] %v1023
        %p1025 = scmp.eq.s32.totalorder %s23, 1
        // Predicated region
        $region49: #{tpu_custom_call.1} parent=43 // pred_check
          %p1026 = pneg %p1025
        $region50: #{tpu_custom_call.1} parent=43 // pred_check_branch
          %1028 = sbr.rel (%p1026) target = $region52
        $region51: #{tpu_custom_call.1} parent=43 // pred_region
          %v1029 = vld [vmem:[%s4] sm:$0xff]
          %v1030 = vld [vmem:[%s4 + $0x8] sm:$0xff]
          %v1031 = vld [vmem:[%s4 + $0x10] sm:$0xff]
          %v1032 = vld [vmem:[%s4 + $0x18] sm:$0xff]
          %v1033 = vld [vmem:[%s4 + $0x20] sm:$0xff]
          %v1034 = vld [vmem:[%s4 + $0x28] sm:$0xff]
          %v1035 = vld [vmem:[%s4 + $0x30] sm:$0xff]
          %v1036 = vld [vmem:[%s4 + $0x38] sm:$0xff]
          %v1037 = vld [vmem:[%s4 + $0x40] sm:$0xff]
          %v1038 = vld [vmem:[%s4 + $0x48] sm:$0xff]
          %v1039 = vld [vmem:[%s4 + $0x50] sm:$0xff]
          %v1040 = vld [vmem:[%s4 + $0x58] sm:$0xff]
          %v1041 = vld [vmem:[%s4 + $0x60] sm:$0xff]
          %v1042 = vld [vmem:[%s4 + $0x68] sm:$0xff]
          %v1043 = vld [vmem:[%s4 + $0x70] sm:$0xff]
          %v1044 = vld [vmem:[%s4 + $0x78] sm:$0xff]
          %v1045 = vld [vmem:[%s5] sm:$0x1]
          %v1047 = vlaneseq
          %v1048 = vshrl.u32 %v1047, 7
          %v1049 = vsub.s32 0, %v1048
          %v1050 = vrot.slane %v1045, %v1049
          %1052 = vmatprep.subr.mxu0 0.0
          %1053 = vmatpush1.msra.mxu0 %v1044
          %1054 = vmatprep.subr.mxu0 0.0
          %1055 = vmatpush1.msra.mxu0 %v1043
          %1056 = vmatprep.subr.mxu0 0.0
          %1057 = vmatpush1.msra.mxu0 %v1042
          %1058 = vmatprep.subr.mxu0 0.0
          %1059 = vmatpush1.msra.mxu0 %v1041
          %1060 = vmatprep.subr.mxu0 0.0
          %1061 = vmatpush1.msra.mxu0 %v1040
          %1062 = vmatprep.subr.mxu0 0.0
          %1063 = vmatpush1.msra.mxu0 %v1039
          %1064 = vmatprep.subr.mxu0 0.0
          %1065 = vmatpush1.msra.mxu0 %v1038
          %1066 = vmatprep.subr.mxu0 0.0
          %1067 = vmatpush1.msra.mxu0 %v1037
          %1068 = vmatprep.subr.mxu0 0.0
          %1069 = vmatpush1.msra.mxu0 %v1036
          %1070 = vmatprep.subr.mxu0 0.0
          %1071 = vmatpush1.msra.mxu0 %v1035
          %1072 = vmatprep.subr.mxu0 0.0
          %1073 = vmatpush1.msra.mxu0 %v1034
          %1074 = vmatprep.subr.mxu0 0.0
          %1075 = vmatpush1.msra.mxu0 %v1033
          %1076 = vmatprep.subr.mxu0 0.0
          %1077 = vmatpush1.msra.mxu0 %v1032
          %1078 = vmatprep.subr.mxu0 0.0
          %1079 = vmatpush1.msra.mxu0 %v1031
          %1080 = vmatprep.subr.mxu0 0.0
          %1081 = vmatpush1.msra.mxu0 %v1030
          %1082 = vmatprep.subr.mxu0 0.0
          %1083 = vmatpush1.msra.mxu0 %v1029
          %1084 = vmatprep.subr.mxu0 0.0
          %1085 = vmatpush2.msra.mxu0 0.0
          %1086 = vmatprep.subr.mxu0 0.0
          %1087 = vmatpush2.msra.mxu0 0.0
          %1088 = vmatprep.subr.mxu0 0.0
          %1089 = vmatpush2.msra.mxu0 0.0
          %1090 = vmatprep.subr.mxu0 0.0
          %1091 = vmatpush2.msra.mxu0 0.0
          %1092 = vmatprep.subr.mxu0 0.0
          %1093 = vmatpush2.msra.mxu0 0.0
          %1094 = vmatprep.subr.mxu0 0.0
          %1095 = vmatpush2.msra.mxu0 0.0
          %1096 = vmatprep.subr.mxu0 0.0
          %1097 = vmatpush2.msra.mxu0 0.0
          %1098 = vmatprep.subr.mxu0 0.0
          %1099 = vmatpush2.msra.mxu0 0.0
          %1100 = vmatprep.subr.mxu0 0.0
          %1101 = vmatpush2.msra.mxu0 0.0
          %1102 = vmatprep.subr.mxu0 0.0
          %1103 = vmatpush2.msra.mxu0 0.0
          %1104 = vmatprep.subr.mxu0 0.0
          %1105 = vmatpush2.msra.mxu0 0.0
          %1106 = vmatprep.subr.mxu0 0.0
          %1107 = vmatpush2.msra.mxu0 0.0
          %1108 = vmatprep.subr.mxu0 0.0
          %1109 = vmatpush2.msra.mxu0 0.0
          %1110 = vmatprep.subr.mxu0 0.0
          %1111 = vmatpush2.msra.mxu0 0.0
          %1112 = vmatprep.subr.mxu0 0.0
          %1113 = vmatpush2.msra.mxu0 0.0
          %1114 = vmatprep.subr.mxu0 0.0
          %1115 = vmatpush2.msra.mxu0 0.0
          %1116 = vmatprep.mubr.f32.mxu0 0.0
          %1117 = vmatmul.mubr.f32.gmra.mxu0 %v1023
          %v1118 = vpop.f32.mrf.mxu0
          %v1119 = vadd.f32 %v1050, %v1118
          %v1120 = vpop.f32.mrf.mxu0
          %1121 = vdwg.mxu0
          %vm1122 = vcmask 64512
          %1123 = vst.msk [vmem:[#allocation4] sm:$0xff] %vm1122, %v1119
        $region52: #{tpu_custom_call.1} parent=43 // pred_fallthru
          _
        // Predicated region
        $region53: #{tpu_custom_call.1} parent=43 // pred_check
          %p1124 = pneg %p181
        $region54: #{tpu_custom_call.1} parent=43 // pred_check_branch
          %1126 = sbr.rel (%p1124) target = $region56
        $region55: #{tpu_custom_call.1} parent=43 // pred_region
          %s1128 = ssub.s32 128, 128
          %1129 = vsyncadd [#allocation5], %s1128
          %s1130 = smul.addr %s22, 128
          %s1131 = scalar_lea.hbm %s6, %s1130
          %s1133 = sshll.u32 [#allocation4], 4
          %s1134 = int_to_ptr.vmem [resolvable:$true] %s1133
          %1136 = dma.vmem_to_hbm [thread:$0]  %s1134, 128, %s1131, [#allocation5]
        $region56: #{tpu_custom_call.1} parent=43 // pred_fallthru
          _
        // Predicated region
        $region57: #{tpu_custom_call.1} parent=43 // pred_check
          %p1137 = pneg %p181
        $region58: #{tpu_custom_call.1} parent=43 // pred_check_branch
          %1139 = sbr.rel (%p1137) target = $region60
        $region59: #{tpu_custom_call.1} parent=43 // pred_region
          %1140 = dma.done [#allocation5], 128
        $region60: #{tpu_custom_call.1} parent=43 // pred_fallthru
          _
      $region44: #{tpu_custom_call.1} parent=5 // pred_fallthru
        _
      %p1141 = scmp.le.s32.totalorder 2, %s13
      // Predicated region
      $region61: #{tpu_custom_call.1} parent=5 // pred_check
        %p1142 = pneg %p1141
      $region62: #{tpu_custom_call.1} parent=5 // pred_check_branch
        %1144 = sbr.rel (%p1142) target = $region64
      $region63: #{tpu_custom_call.1} parent=5 // pred_region
        %s1145 = ssub.s32 %s13, 2
      $region64: #{tpu_custom_call.1} parent=5 // pred_fallthru
        _
    $region6: #{tpu_custom_call.1} parent=1 // loop_footer
      %s17 = sadd.s32 1, %s13
    $region7: #{tpu_custom_call.1} parent=1 // loop_footer_branch
      %12 = sbr.rel target = $region3
    $region8: #{tpu_custom_call.1} parent=1 // loop_exit
      _
    %1146 = vsyncpa [#allocation5], 1
    %s1147 = scalar_lea.sflag [#allocation5], 1
    %1148 = vsyncpa %s1147, 1

</llo_original>
